<compile_context>
chip_gen: v5e
topology: v5e:2x2
jax: 0.10.0
libtpu: 0.0.40
codegen_flags: <defaults>
</compile_context>

<pallas_src>
import jax
import jax.numpy as jnp
from jax.experimental import pallas as pl
from jax.experimental.pallas import tpu as pltpu

_NEG_BIG = -1e30  # finite "minus infinity" for masked (padded) softmax columns


def _round_up(x, m):
    return (x + m - 1) // m * m


def _make_lse_kernel(inv_tau, has_bias):
    """Kernel: per-row online log-sum-exp of (f1 @ f2.T) * inv_tau."""

    def kernel(*refs):
        if has_bias:
            f1_ref, f2t_ref, bias_ref, lse_ref, m_ref, s_ref = refs
        else:
            f1_ref, f2t_ref, lse_ref, m_ref, s_ref = refs
            bias_ref = None

        k = pl.program_id(1)  # column-tile index ("arbitrary", reduction axis)

        @pl.when(k == 0)
        def _():
            m_ref[...] = jnp.full_like(m_ref, _NEG_BIG)
            s_ref[...] = jnp.zeros_like(s_ref)

        # Plain NN contraction on the MXU; scale the f32 result (exact, and
        # avoids re-scaling the (tile_bq, D) operand every column step).
        logits = jnp.dot(f1_ref[...], f2t_ref[...],
                         preferred_element_type=jnp.float32) * inv_tau
        if bias_ref is not None:
            # 0 for valid columns, -1e30 for padded ones (single add/element).
            logits = logits + bias_ref[...]

        # ---- online (flash-style) log-sum-exp over valid columns ----
        m_prev = m_ref[...]
        m_new = jnp.maximum(m_prev, jnp.max(logits, axis=1, keepdims=True))
        s_ref[...] = (s_ref[...] * jnp.exp(m_prev - m_new)
                      + jnp.sum(jnp.exp(logits - m_new), axis=1, keepdims=True))
        m_ref[...] = m_new

        @pl.when(k == pl.num_programs(1) - 1)
        def _():
            lse_ref[...] = m_ref[...] + jnp.log(s_ref[...])

    return kernel


def _choose_tiles(b, d_pad, itemsize, tile_bq=None, tile_bk=None):
    """Generation-aware tile selection (row tile = HBM-traffic lever)."""
    try:
        vmem_cap = int(pltpu.get_tpu_info().vmem_capacity_bytes)
    except Exception:  # pragma: no cover - conservative fallback
        vmem_cap = 64 * 1024 * 1024
    budget = int(vmem_cap * 0.55)          # working-set target
    vmem_limit = int(vmem_cap * 0.75)      # scoped-VMEM limit passed to Mosaic

    align = 256
    cap = _round_up(b, align)              # bounds padding waste to < 1 tile

    tq = tile_bq if tile_bq is not None else (1024 if itemsize <= 2 else 512)
    tk = tile_bk if tile_bk is not None else 1024
    tq = min(tq, cap)
    tk = min(tk, cap)

    # On v7x keep >= 2 row tiles so the "parallel" axis spans both TensorCores.
    try:
        kind = jax.devices()[0].device_kind.lower()
    except Exception:  # pragma: no cover
        kind = ""
    if tile_bq is None and "v7" in kind and cap >= 2 * align:
        tq = min(tq, _round_up((b + 1) // 2, align))

    def est(q, kk):
        return (2 * q * d_pad * itemsize      # f1 tile, double-buffered
                + 2 * d_pad * kk * itemsize   # f2^T tile, double-buffered
                + 2 * kk * 4 + 4 * q * 4      # col bias + (q,1) output blocks
                + 2 * q * 4                   # m/s scratch
                + 4 * q * kk * 4)             # f32 logits / exp temporaries

    # Shrink the column tile first (it does not change HBM traffic), rows last.
    while est(tq, tk) > budget and tk > 256:
        tk = max(256, (tk // 2) // 128 * 128)
    while est(tq, tk) > budget and tq > 256:
        tq = max(256, (tq // 2) // 8 * 8)

    tq = _round_up(tq, 8)      # sublane multiple for the M dim
    tk = _round_up(tk, 128)    # lane multiple for the N dim
    return tq, tk, vmem_limit


def firm_loss(f1, f2, labels, *, tau=0.2, inlier_label=1,
              tile_bq=None, tile_bk=None):
    """f1, f2: (B, D) float arrays (assumed normalized); labels: (B,) ints."""
    b, d = f1.shape
    itemsize = jnp.dtype(f1.dtype).itemsize
    inv_tau = float(1.0 / tau)

    d_pad = _round_up(d, 128)
    tq, tk, vmem_limit = _choose_tiles(b, d_pad, itemsize, tile_bq, tile_bk)

    # Independent per-axis padding (waste < 1 tile per axis).
    b_row_pad = _round_up(b, tq)
    b_col_pad = _round_up(b, tk)
    has_bias = (b_col_pad != b)

    f1_p = jnp.pad(f1, ((0, b_row_pad - b), (0, d_pad - d)))
    # One-time O(B*D) transpose so the kernel streams a lane-dense (D, B) slab.
    f2t_p = jnp.pad(f2, ((0, b_col_pad - b), (0, d_pad - d))).T  # (d_pad, b_col_pad)

    inputs = [f1_p, f2t_p]
    in_specs = [
        pl.BlockSpec((tq, d_pad), lambda i, k: (i, 0)),   # f1 row tile
        pl.BlockSpec((d_pad, tk), lambda i, k: (0, k)),   # f2^T column tile
    ]
    if has_bias:
        col_bias = jnp.where(jnp.arange(b_col_pad) < b, 0.0, _NEG_BIG)
        col_bias = col_bias.reshape(1, b_col_pad).astype(jnp.float32)
        inputs.append(col_bias)
        in_specs.append(pl.BlockSpec((1, tk), lambda i, k: (0, k)))

    grid = (b_row_pad // tq, b_col_pad // tk)

    cost = pl.CostEstimate(
        flops=2 * b_row_pad * b_col_pad * d_pad + 8 * b_row_pad * b_col_pad,
        transcendentals=b_row_pad * b_col_pad + b_row_pad,
        bytes_accessed=(b_row_pad * d_pad * itemsize              # f1 once
                        + grid[0] * b_col_pad * d_pad * itemsize  # f2 per row tile
                        + b_row_pad * 4))

    per_row_lse = pl.pallas_call(
        _make_lse_kernel(inv_tau, has_bias),
        out_shape=jax.ShapeDtypeStruct((b_row_pad, 1), jnp.float32),
        grid_spec=pltpu.PrefetchScalarGridSpec(
            num_scalar_prefetch=0,
            grid=grid,
            in_specs=in_specs,
            out_specs=pl.BlockSpec((tq, 1), lambda i, k: (i, 0)),
            scratch_shapes=[pltpu.VMEM((tq, 1), jnp.float32),     # running max
                            pltpu.VMEM((tq, 1), jnp.float32)],    # running sum
        ),
        compiler_params=pltpu.CompilerParams(
            dimension_semantics=("parallel", "arbitrary"),
            vmem_limit_bytes=vmem_limit),
        cost_estimate=cost,
    )(*inputs)

    lse = per_row_lse[:b, 0]                                       # (b,)

    # Closed-form target-distribution terms (O(B*D) XLA work, f32 throughout):
    #   inlier row i : t_i = f1_i . (sum_{j inlier} f2_j) / tau, c_i = n_inliers
    #   other  row i : t_i = f1_i . f2_i / tau,                  c_i = 1
    f1_32 = f1.astype(jnp.float32)
    f2_32 = f2.astype(jnp.float32)
    inlier = (labels.reshape(-1) == inlier_label).astype(jnp.float32)   # (b,)
    n_inlier = jnp.sum(inlier)
    sum_f2_inlier = jnp.sum(f2_32 * inlier[:, None], axis=0)            # (d,)
    t_inlier = (f1_32 @ sum_f2_inlier) * inv_tau                        # (b,)
    t_diag = jnp.sum(f1_32 * f2_32, axis=1) * inv_tau                   # (b,)
    t = jnp.where(inlier > 0.5, t_inlier, t_diag)
    c = jnp.where(inlier > 0.5, n_inlier, 1.0)

    # sum_j p_ij * q_ij = (sum_j mask*logits - c_i * lse_i) / clamp(c_i, 1)
    per_row = (t - c * lse) / jnp.maximum(c, 1.0)
    return -jnp.sum(per_row) / jnp.float32(b)


def _firm_loss_ref(f1, f2, labels, *, tau=0.2, inlier_label=1):
    """Pure-JAX reference mirroring the PyTorch forward."""
    logits = (f1 @ f2.T) / tau
    q = jax.nn.log_softmax(logits, axis=1)
    b = f1.shape[0]
    inlier = (labels.reshape(-1, 1) == inlier_label).astype(jnp.float32)
    inlier_mask = inlier @ inlier.T
    non_inlier_mask = jnp.eye(b, dtype=jnp.float32) * (1.0 - inlier)
    mask = inlier_mask + non_inlier_mask
    p = mask / jnp.clip(jnp.sum(mask, axis=1, keepdims=True), 1.0, None)
    return -jnp.sum(p * q) / b


if __name__ == "__main__":
    B, D = 8, 32
    key = jax.random.PRNGKey(0)
    k1, k2, k3 = jax.random.split(key, 3)

    f1 = jax.random.normal(k1, (B, D), dtype=jnp.float32)
    f2 = jax.random.normal(k2, (B, D), dtype=jnp.float32)
    # features are assumed normalized
    f1 = f1 / jnp.linalg.norm(f1, axis=1, keepdims=True)
    f2 = f2 / jnp.linalg.norm(f2, axis=1, keepdims=True)
    labels = jax.random.bernoulli(k3, 0.6, (B,)).astype(jnp.int32)

    loss = firm_loss(f1, f2, labels, tau=0.2, inlier_label=1)
    jax.block_until_ready(loss)

    ref = _firm_loss_ref(f1, f2, labels, tau=0.2, inlier_label=1)
    assert jnp.allclose(loss, ref, atol=1e-5, rtol=1e-5), (loss, ref)

    print("KERNEL_OK")
</pallas_src>

<mosaic_0001>
module attributes {stable_mosaic.version = 11 : i64} {
  func.func @kernel(%arg0: i32, %arg1: i32, %arg2: memref<256x128xf32, #tpu.memory_space<vmem>>, %arg3: memref<128x256xf32, #tpu.memory_space<vmem>>, %arg4: memref<1x256xf32, #tpu.memory_space<vmem>>, %arg5: memref<256x1xf32, #tpu.memory_space<vmem>>, %arg6: memref<256x1xf32, #tpu.memory_space<vmem>>, %arg7: memref<256x1xf32, #tpu.memory_space<vmem>>) attributes {dimension_semantics = [#tpu.dimension_semantics<parallel>, #tpu.dimension_semantics<arbitrary>], iteration_bounds = array<i64: 1, 1>, scalar_prefetch = 0 : i64, scratch_operands = 2 : i64, tpu.core_type = #tpu.core_type<tc>, window_params = [{transform_indices = @transform_0, window_bounds = array<i64: 256, 128>}, {transform_indices = @transform_1, window_bounds = array<i64: 128, 256>}, {transform_indices = @transform_2, window_bounds = array<i64: 1, 256>}, {transform_indices = @transform_3, window_bounds = array<i64: 256, 1>}]} {
    %c0_i32 = arith.constant 0 : i32
    %0 = arith.cmpi eq, %arg1, %c0_i32 : i32
    %1 = arith.extui %0 : i1 to i32
    %c0_i32_0 = arith.constant 0 : i32
    %2 = arith.cmpi ne, %1, %c0_i32_0 : i32
    scf.if %2 {
      %cst_19 = arith.constant -1.000000e+30 : f32
      %30 = vector.broadcast %cst_19 : f32 to vector<256x1xf32>
      %c0_20 = arith.constant 0 : index
      %c0_21 = arith.constant 0 : index
      %31 = vector.load %arg6[%c0_20, %c0_21] : memref<256x1xf32, #tpu.memory_space<vmem>>, vector<256x1xf32>
      tpu.vector_store %arg6[%c0_20, %c0_21], %30 {strides = array<i32>} : memref<256x1xf32, #tpu.memory_space<vmem>>, vector<256x1xf32>,
      %cst_22 = arith.constant 0.000000e+00 : f32
      %32 = vector.broadcast %cst_22 : f32 to vector<256x1xf32>
      %c0_23 = arith.constant 0 : index
      %c0_24 = arith.constant 0 : index
      %33 = vector.load %arg7[%c0_23, %c0_24] : memref<256x1xf32, #tpu.memory_space<vmem>>, vector<256x1xf32>
      tpu.vector_store %arg7[%c0_23, %c0_24], %32 {strides = array<i32>} : memref<256x1xf32, #tpu.memory_space<vmem>>, vector<256x1xf32>,
    } else {
    }
    %c0 = arith.constant 0 : index
    %c0_1 = arith.constant 0 : index
    %3 = vector.load %arg2[%c0, %c0_1] : memref<256x128xf32, #tpu.memory_space<vmem>>, vector<256x128xf32>
    %c0_2 = arith.constant 0 : index
    %c0_3 = arith.constant 0 : index
    %4 = vector.load %arg3[%c0_2, %c0_3] : memref<128x256xf32, #tpu.memory_space<vmem>>, vector<128x256xf32>
    %cst = arith.constant dense<0.000000e+00> : vector<256x256xf32>
    %5 = tpu.matmul %3, %4, %cst {dimension_numbers = #tpu.dot_dimension_numbers<[1], [0], [0], [1], [0, 0, 1, 1], [], []>} : vector<256x128xf32>, vector<128x256xf32>, vector<256x256xf32> -> vector<256x256xf32>
    %cst_4 = arith.constant 5.000000e+00 : f32
    %6 = vector.broadcast %cst_4 : f32 to vector<256x256xf32>
    %7 = arith.mulf %5, %6 : vector<256x256xf32>
    %c0_5 = arith.constant 0 : index
    %c0_6 = arith.constant 0 : index
    %8 = vector.load %arg4[%c0_5, %c0_6] : memref<1x256xf32, #tpu.memory_space<vmem>>, vector<1x256xf32>
    %9 = vector.broadcast %8 : vector<1x256xf32> to vector<256x256xf32>
    %10 = arith.addf %7, %9 : vector<256x256xf32>
    %c0_7 = arith.constant 0 : index
    %c0_8 = arith.constant 0 : index
    %11 = vector.load %arg6[%c0_7, %c0_8] : memref<256x1xf32, #tpu.memory_space<vmem>>, vector<256x1xf32>
    %cst_9 = arith.constant dense<0xFF800000> : vector<256xf32>
    %12 = vector.multi_reduction <maximumf>, %10, %cst_9 [1] : vector<256x256xf32> to vector<256xf32>
    %13 = vector.shape_cast %12 : vector<256xf32> to vector<256x1xf32>
    %14 = arith.maximumf %11, %13 : vector<256x1xf32>
    %c0_10 = arith.constant 0 : index
    %c0_11 = arith.constant 0 : index
    %15 = vector.load %arg7[%c0_10, %c0_11] : memref<256x1xf32, #tpu.memory_space<vmem>>, vector<256x1xf32>
    %16 = arith.subf %11, %14 : vector<256x1xf32>
    %17 = math.exp %16 : vector<256x1xf32>
    %18 = arith.mulf %15, %17 : vector<256x1xf32>
    %19 = vector.broadcast %14 : vector<256x1xf32> to vector<256x256xf32>
    %20 = arith.subf %10, %19 : vector<256x256xf32>
    %21 = math.exp %20 : vector<256x256xf32>
    %cst_12 = arith.constant dense<0.000000e+00> : vector<256xf32>
    %22 = vector.multi_reduction <add>, %21, %cst_12 [1] : vector<256x256xf32> to vector<256xf32>
    %23 = vector.shape_cast %22 : vector<256xf32> to vector<256x1xf32>
    %24 = arith.addf %18, %23 : vector<256x1xf32>
    %c0_13 = arith.constant 0 : index
    %c0_14 = arith.constant 0 : index
    %25 = vector.load %arg7[%c0_13, %c0_14] : memref<256x1xf32, #tpu.memory_space<vmem>>, vector<256x1xf32>
    tpu.vector_store %arg7[%c0_13, %c0_14], %24 {strides = array<i32>} : memref<256x1xf32, #tpu.memory_space<vmem>>, vector<256x1xf32>,
    %c0_15 = arith.constant 0 : index
    %c0_16 = arith.constant 0 : index
    %26 = vector.load %arg6[%c0_15, %c0_16] : memref<256x1xf32, #tpu.memory_space<vmem>>, vector<256x1xf32>
    tpu.vector_store %arg6[%c0_15, %c0_16], %14 {strides = array<i32>} : memref<256x1xf32, #tpu.memory_space<vmem>>, vector<256x1xf32>,
    %c0_i32_17 = arith.constant 0 : i32
    %27 = arith.cmpi eq, %arg1, %c0_i32_17 : i32
    %28 = arith.extui %27 : i1 to i32
    %c0_i32_18 = arith.constant 0 : i32
    %29 = arith.cmpi ne, %28, %c0_i32_18 : i32
    scf.if %29 {
      %c0_19 = arith.constant 0 : index
      %c0_20 = arith.constant 0 : index
      %30 = vector.load %arg6[%c0_19, %c0_20] : memref<256x1xf32, #tpu.memory_space<vmem>>, vector<256x1xf32>
      %c0_21 = arith.constant 0 : index
      %c0_22 = arith.constant 0 : index
      %31 = vector.load %arg7[%c0_21, %c0_22] : memref<256x1xf32, #tpu.memory_space<vmem>>, vector<256x1xf32>
      %32 = math.log %31 : vector<256x1xf32>
      %33 = arith.addf %30, %32 : vector<256x1xf32>
      %c0_23 = arith.constant 0 : index
      %c0_24 = arith.constant 0 : index
      %34 = vector.load %arg5[%c0_23, %c0_24] : memref<256x1xf32, #tpu.memory_space<vmem>>, vector<256x1xf32>
      tpu.vector_store %arg5[%c0_23, %c0_24], %33 {strides = array<i32>} : memref<256x1xf32, #tpu.memory_space<vmem>>, vector<256x1xf32>,
    } else {
    }
    return
  }
  func.func @transform_0(%arg0: i32, %arg1: i32) -> (i32, i32) {
    %c0_i32 = arith.constant 0 : i32
    %c0_i32_0 = arith.constant 0 : i32
    return %arg0, %c0_i32 : i32, i32
  }
  func.func @transform_1(%arg0: i32, %arg1: i32) -> (i32, i32) {
    %c0_i32 = arith.constant 0 : i32
    %c0_i32_0 = arith.constant 0 : i32
    return %c0_i32, %arg1 : i32, i32
  }
  func.func @transform_2(%arg0: i32, %arg1: i32) -> (i32, i32) {
    %c0_i32 = arith.constant 0 : i32
    %c0_i32_0 = arith.constant 0 : i32
    return %c0_i32, %arg1 : i32, i32
  }
  func.func @transform_3(%arg0: i32, %arg1: i32) -> (i32, i32) {
    %c0_i32 = arith.constant 0 : i32
    %c0_i32_0 = arith.constant 0 : i32
    return %arg0, %c0_i32 : i32, i32
  }
}

</mosaic_0001>

<llo_original>
// kernel: tpu_custom_call.1
$region0: #{tpu_custom_call.1}
  #allocation0 [shape = 'u32[]', space=smem, size = 0x4, offset = 0x4, fixed_abs, tag = 'smem constant byte address 0x4 - core index']
  #allocation1 [shape = 'u32[72,128]{1,0:T(1,128)}', space=vmem, size = 0x9000, scoped, tag = 'internal scratch']
  #allocation2 [shape = 'f32[256,1]{1,0:T(8,128)}', space=vmem, size = 0x20000, scoped, tag = 'scratch operand']
  #allocation3 [shape = 'f32[256,1]{1,0:T(8,128)}', space=vmem, size = 0x20000, scoped, tag = 'scratch operand']
  %s0 = inlined_call_operand.hbm [shape: f32[256,128], index: 0, kind: input, shape index: {}]
  %s1 = inlined_call_operand.hbm [shape: f32[128,256], index: 1, kind: input, shape index: {}]
  %s2 = inlined_call_operand.hbm [shape: f32[1,256], index: 2, kind: input, shape index: {}]
  %s3 = inlined_call_operand.vmem [shape: f32[256,1], index: 3, kind: output, shape index: {}]
  %s4 = sld [smem:[#allocation0]]
  $region42: #{tpu_custom_call.1} parent=0
    _
  %s6 = ssub.s32 1, %s4
  %s7 = scalar_select 0, %s6, %s4
  $region1: #{tpu_custom_call.1} parent=0
    #allocation4 [shape = 'u8[131072]{0}', space=vmem, size = 0x20000, scoped, tag = 'input window, operand 0, single buffered']
    #allocation5 [shape = 's32[1]{0}', space=sflag, size = 0x4, scoped, tag = 'scoped memory for tpu_custom_call.1']
    #allocation6 [shape = 'u8[131072]{0}', space=vmem, size = 0x20000, scoped, tag = 'input window, operand 1, single buffered']
    #allocation7 [shape = 's32[1]{0}', space=sflag, size = 0x4, scoped, tag = 'scoped memory for tpu_custom_call.1']
    #allocation8 [shape = 'u8[1024]{0}', space=vmem, size = 0x400, scoped, tag = 'input window, operand 2, single buffered']
    %8 = vsyncpa [#allocation5], 0
    %9 = vsyncpa [#allocation7], 0
    // Predicated region
    $region2: #{tpu_custom_call.1} parent=1 // pred_check
      _
    $region3: #{tpu_custom_call.1} parent=1 // pred_check_branch
      %11 = sbr.rel (0) target = $region5
    $region4: #{tpu_custom_call.1} parent=1 // pred_region
      %13 = vsyncadd [#allocation5], 0
      %s14 = sshll.u32 %s0, 4
      %s15 = int_to_ptr.hbm [resolvable:$true] %s14
      %s16 = sshll.u32 [#allocation4], 4
      %s17 = int_to_ptr.vmem [resolvable:$true] %s16
      %22 = dma.hbm_to_vmem [thread:$0]  %s15, 4096, %s17, [#allocation5], 128, 128, 8
    $region5: #{tpu_custom_call.1} parent=1 // pred_fallthru
      _
    // Predicated region
    $region6: #{tpu_custom_call.1} parent=1 // pred_check
      _
    $region7: #{tpu_custom_call.1} parent=1 // pred_check_branch
      %24 = sbr.rel (0) target = $region9
    $region8: #{tpu_custom_call.1} parent=1 // pred_region
      %26 = vsyncadd [#allocation7], 0
      %s27 = sshll.u32 %s1, 4
      %s28 = int_to_ptr.hbm [resolvable:$true] %s27
      %s29 = sshll.u32 [#allocation6], 4
      %s30 = int_to_ptr.vmem [resolvable:$true] %s29
      %35 = dma.hbm_to_vmem [thread:$0]  %s28, 4096, %s30, [#allocation7], 256, 256, 16
    $region9: #{tpu_custom_call.1} parent=1 // pred_fallthru
      _
    // Predicated region
    $region10: #{tpu_custom_call.1} parent=1 // pred_check
      _
    $region11: #{tpu_custom_call.1} parent=1 // pred_check_branch
      %37 = sbr.rel (0) target = $region13
    $region12: #{tpu_custom_call.1} parent=1 // pred_region
      %39 = vsyncadd [#allocation7], 0
      %s41 = sshll.u32 %s2, 4
      %s42 = int_to_ptr.hbm [resolvable:$true] %s41
      %s43 = sshll.u32 [#allocation8], 4
      %s44 = int_to_ptr.vmem [resolvable:$true] %s43
      %46 = dma.hbm_to_vmem [thread:$0]  %s42, 32, %s44, [#allocation7]
    $region13: #{tpu_custom_call.1} parent=1 // pred_fallthru
      _
    // Predicated region
    $region14: #{tpu_custom_call.1} parent=1 // pred_check
      _
    $region15: #{tpu_custom_call.1} parent=1 // pred_check_branch
      %48 = sbr.rel (0) target = $region17
    $region16: #{tpu_custom_call.1} parent=1 // pred_region
      %50 = dma.done [#allocation5], 4096
    $region17: #{tpu_custom_call.1} parent=1 // pred_fallthru
      _
    // Predicated region
    $region18: #{tpu_custom_call.1} parent=1 // pred_check
      _
    $region19: #{tpu_custom_call.1} parent=1 // pred_check_branch
      %52 = sbr.rel (0) target = $region21
    $region20: #{tpu_custom_call.1} parent=1 // pred_region
      %54 = dma.done [#allocation7], 4096
    $region21: #{tpu_custom_call.1} parent=1 // pred_fallthru
      _
    // Predicated region
    $region22: #{tpu_custom_call.1} parent=1 // pred_check
      _
    $region23: #{tpu_custom_call.1} parent=1 // pred_check_branch
      %56 = sbr.rel (0) target = $region25
    $region24: #{tpu_custom_call.1} parent=1 // pred_region
      %58 = dma.done [#allocation7], 32
    $region25: #{tpu_custom_call.1} parent=1 // pred_fallthru
      _
    %p59 = scmp.eq.s32.totalorder 0, 0
    // Predicated region
    $region26: #{tpu_custom_call.1} parent=1 // pred_check
      %p60 = pneg %p59
    $region27: #{tpu_custom_call.1} parent=1 // pred_check_branch
      %62 = sbr.rel (%p60) target = $region29
    $region28: #{tpu_custom_call.1} parent=1 // pred_region
      %vm63 = vcmask 7168
      %64 = vst.msk [vmem:[#allocation2] sm:$0xff] %vm63, -1e+30
      %65 = vst.msk [vmem:[#allocation2 + $0x8] sm:$0xff] %vm63, -1e+30
      %66 = vst.msk [vmem:[#allocation2 + $0x10] sm:$0xff] %vm63, -1e+30
      %67 = vst.msk [vmem:[#allocation2 + $0x18] sm:$0xff] %vm63, -1e+30
      %68 = vst.msk [vmem:[#allocation2 + $0x20] sm:$0xff] %vm63, -1e+30
      %69 = vst.msk [vmem:[#allocation2 + $0x28] sm:$0xff] %vm63, -1e+30
      %70 = vst.msk [vmem:[#allocation2 + $0x30] sm:$0xff] %vm63, -1e+30
      %71 = vst.msk [vmem:[#allocation2 + $0x38] sm:$0xff] %vm63, -1e+30
      %72 = vst.msk [vmem:[#allocation2 + $0x40] sm:$0xff] %vm63, -1e+30
      %73 = vst.msk [vmem:[#allocation2 + $0x48] sm:$0xff] %vm63, -1e+30
      %74 = vst.msk [vmem:[#allocation2 + $0x50] sm:$0xff] %vm63, -1e+30
      %75 = vst.msk [vmem:[#allocation2 + $0x58] sm:$0xff] %vm63, -1e+30
      %76 = vst.msk [vmem:[#allocation2 + $0x60] sm:$0xff] %vm63, -1e+30
      %77 = vst.msk [vmem:[#allocation2 + $0x68] sm:$0xff] %vm63, -1e+30
      %78 = vst.msk [vmem:[#allocation2 + $0x70] sm:$0xff] %vm63, -1e+30
      %79 = vst.msk [vmem:[#allocation2 + $0x78] sm:$0xff] %vm63, -1e+30
      %80 = vst.msk [vmem:[#allocation2 + $0x80] sm:$0xff] %vm63, -1e+30
      %81 = vst.msk [vmem:[#allocation2 + $0x88] sm:$0xff] %vm63, -1e+30
      %82 = vst.msk [vmem:[#allocation2 + $0x90] sm:$0xff] %vm63, -1e+30
      %83 = vst.msk [vmem:[#allocation2 + $0x98] sm:$0xff] %vm63, -1e+30
      %84 = vst.msk [vmem:[#allocation2 + $0xa0] sm:$0xff] %vm63, -1e+30
      %85 = vst.msk [vmem:[#allocation2 + $0xa8] sm:$0xff] %vm63, -1e+30
      %86 = vst.msk [vmem:[#allocation2 + $0xb0] sm:$0xff] %vm63, -1e+30
      %87 = vst.msk [vmem:[#allocation2 + $0xb8] sm:$0xff] %vm63, -1e+30
      %88 = vst.msk [vmem:[#allocation2 + $0xc0] sm:$0xff] %vm63, -1e+30
      %89 = vst.msk [vmem:[#allocation2 + $0xc8] sm:$0xff] %vm63, -1e+30
      %90 = vst.msk [vmem:[#allocation2 + $0xd0] sm:$0xff] %vm63, -1e+30
      %91 = vst.msk [vmem:[#allocation2 + $0xd8] sm:$0xff] %vm63, -1e+30
      %92 = vst.msk [vmem:[#allocation2 + $0xe0] sm:$0xff] %vm63, -1e+30
      %93 = vst.msk [vmem:[#allocation2 + $0xe8] sm:$0xff] %vm63, -1e+30
      %94 = vst.msk [vmem:[#allocation2 + $0xf0] sm:$0xff] %vm63, -1e+30
      %95 = vst.msk [vmem:[#allocation2 + $0xf8] sm:$0xff] %vm63, -1e+30
      %96 = vst.msk [vmem:[#allocation3] sm:$0xff] %vm63, 0.0
      %97 = vst.msk [vmem:[#allocation3 + $0x8] sm:$0xff] %vm63, 0.0
      %98 = vst.msk [vmem:[#allocation3 + $0x10] sm:$0xff] %vm63, 0.0
      %99 = vst.msk [vmem:[#allocation3 + $0x18] sm:$0xff] %vm63, 0.0
      %100 = vst.msk [vmem:[#allocation3 + $0x20] sm:$0xff] %vm63, 0.0
      %101 = vst.msk [vmem:[#allocation3 + $0x28] sm:$0xff] %vm63, 0.0
      %102 = vst.msk [vmem:[#allocation3 + $0x30] sm:$0xff] %vm63, 0.0
      %103 = vst.msk [vmem:[#allocation3 + $0x38] sm:$0xff] %vm63, 0.0
      %104 = vst.msk [vmem:[#allocation3 + $0x40] sm:$0xff] %vm63, 0.0
      %105 = vst.msk [vmem:[#allocation3 + $0x48] sm:$0xff] %vm63, 0.0
      %106 = vst.msk [vmem:[#allocation3 + $0x50] sm:$0xff] %vm63, 0.0
      %107 = vst.msk [vmem:[#allocation3 + $0x58] sm:$0xff] %vm63, 0.0
      %108 = vst.msk [vmem:[#allocation3 + $0x60] sm:$0xff] %vm63, 0.0
      %109 = vst.msk [vmem:[#allocation3 + $0x68] sm:$0xff] %vm63, 0.0
      %110 = vst.msk [vmem:[#allocation3 + $0x70] sm:$0xff] %vm63, 0.0
      %111 = vst.msk [vmem:[#allocation3 + $0x78] sm:$0xff] %vm63, 0.0
      %112 = vst.msk [vmem:[#allocation3 + $0x80] sm:$0xff] %vm63, 0.0
      %113 = vst.msk [vmem:[#allocation3 + $0x88] sm:$0xff] %vm63, 0.0
      %114 = vst.msk [vmem:[#allocation3 + $0x90] sm:$0xff] %vm63, 0.0
      %115 = vst.msk [vmem:[#allocation3 + $0x98] sm:$0xff] %vm63, 0.0
      %116 = vst.msk [vmem:[#allocation3 + $0xa0] sm:$0xff] %vm63, 0.0
      %117 = vst.msk [vmem:[#allocation3 + $0xa8] sm:$0xff] %vm63, 0.0
      %118 = vst.msk [vmem:[#allocation3 + $0xb0] sm:$0xff] %vm63, 0.0
      %119 = vst.msk [vmem:[#allocation3 + $0xb8] sm:$0xff] %vm63, 0.0
      %120 = vst.msk [vmem:[#allocation3 + $0xc0] sm:$0xff] %vm63, 0.0
      %121 = vst.msk [vmem:[#allocation3 + $0xc8] sm:$0xff] %vm63, 0.0
      %122 = vst.msk [vmem:[#allocation3 + $0xd0] sm:$0xff] %vm63, 0.0
      %123 = vst.msk [vmem:[#allocation3 + $0xd8] sm:$0xff] %vm63, 0.0
      %124 = vst.msk [vmem:[#allocation3 + $0xe0] sm:$0xff] %vm63, 0.0
      %125 = vst.msk [vmem:[#allocation3 + $0xe8] sm:$0xff] %vm63, 0.0
      %126 = vst.msk [vmem:[#allocation3 + $0xf0] sm:$0xff] %vm63, 0.0
      %127 = vst.msk [vmem:[#allocation3 + $0xf8] sm:$0xff] %vm63, 0.0
    $region29: #{tpu_custom_call.1} parent=1 // pred_fallthru
      _
    %v128 = vld [vmem:[#allocation4] sm:$0xff]
    %v129 = vld [vmem:[#allocation4 + $0x8] sm:$0xff]
    %v130 = vld [vmem:[#allocation4 + $0x10] sm:$0xff]
    %v131 = vld [vmem:[#allocation4 + $0x18] sm:$0xff]
    %v132 = vld [vmem:[#allocation4 + $0x20] sm:$0xff]
    %v133 = vld [vmem:[#allocation4 + $0x28] sm:$0xff]
    %v134 = vld [vmem:[#allocation4 + $0x30] sm:$0xff]
    %v135 = vld [vmem:[#allocation4 + $0x38] sm:$0xff]
    %v136 = vld [vmem:[#allocation4 + $0x40] sm:$0xff]
    %v137 = vld [vmem:[#allocation4 + $0x48] sm:$0xff]
    %v138 = vld [vmem:[#allocation4 + $0x50] sm:$0xff]
    %v139 = vld [vmem:[#allocation4 + $0x58] sm:$0xff]
    %v140 = vld [vmem:[#allocation4 + $0x60] sm:$0xff]
    %v141 = vld [vmem:[#allocation4 + $0x68] sm:$0xff]
    %v142 = vld [vmem:[#allocation4 + $0x70] sm:$0xff]
    %v143 = vld [vmem:[#allocation4 + $0x78] sm:$0xff]
    %v144 = vld [vmem:[#allocation4 + $0x80] sm:$0xff]
    %v145 = vld [vmem:[#allocation4 + $0x88] sm:$0xff]
    %v146 = vld [vmem:[#allocation4 + $0x90] sm:$0xff]
    %v147 = vld [vmem:[#allocation4 + $0x98] sm:$0xff]
    %v148 = vld [vmem:[#allocation4 + $0xa0] sm:$0xff]
    %v149 = vld [vmem:[#allocation4 + $0xa8] sm:$0xff]
    %v150 = vld [vmem:[#allocation4 + $0xb0] sm:$0xff]
    %v151 = vld [vmem:[#allocation4 + $0xb8] sm:$0xff]
    %v152 = vld [vmem:[#allocation4 + $0xc0] sm:$0xff]
    %v153 = vld [vmem:[#allocation4 + $0xc8] sm:$0xff]
    %v154 = vld [vmem:[#allocation4 + $0xd0] sm:$0xff]
    %v155 = vld [vmem:[#allocation4 + $0xd8] sm:$0xff]
    %v156 = vld [vmem:[#allocation4 + $0xe0] sm:$0xff]
    %v157 = vld [vmem:[#allocation4 + $0xe8] sm:$0xff]
    %v158 = vld [vmem:[#allocation4 + $0xf0] sm:$0xff]
    %v159 = vld [vmem:[#allocation4 + $0xf8] sm:$0xff]
    %v160 = vld [vmem:[#allocation6] sm:$0xff]
    %v161 = vld [vmem:[#allocation6 + $0x8] sm:$0xff]
    %v162 = vld [vmem:[#allocation6 + $0x10] sm:$0xff]
    %v163 = vld [vmem:[#allocation6 + $0x18] sm:$0xff]
    %v164 = vld [vmem:[#allocation6 + $0x20] sm:$0xff]
    %v165 = vld [vmem:[#allocation6 + $0x28] sm:$0xff]
    %v166 = vld [vmem:[#allocation6 + $0x30] sm:$0xff]
    %v167 = vld [vmem:[#allocation6 + $0x38] sm:$0xff]
    %v168 = vld [vmem:[#allocation6 + $0x40] sm:$0xff]
    %v169 = vld [vmem:[#allocation6 + $0x48] sm:$0xff]
    %v170 = vld [vmem:[#allocation6 + $0x50] sm:$0xff]
    %v171 = vld [vmem:[#allocation6 + $0x58] sm:$0xff]
    %v172 = vld [vmem:[#allocation6 + $0x60] sm:$0xff]
    %v173 = vld [vmem:[#allocation6 + $0x68] sm:$0xff]
    %v174 = vld [vmem:[#allocation6 + $0x70] sm:$0xff]
    %v175 = vld [vmem:[#allocation6 + $0x78] sm:$0xff]
    %v176 = vld [vmem:[#allocation6 + $0x80] sm:$0xff]
    %v177 = vld [vmem:[#allocation6 + $0x88] sm:$0xff]
    %v178 = vld [vmem:[#allocation6 + $0x90] sm:$0xff]
    %v179 = vld [vmem:[#allocation6 + $0x98] sm:$0xff]
    %v180 = vld [vmem:[#allocation6 + $0xa0] sm:$0xff]
    %v181 = vld [vmem:[#allocation6 + $0xa8] sm:$0xff]
    %v182 = vld [vmem:[#allocation6 + $0xb0] sm:$0xff]
    %v183 = vld [vmem:[#allocation6 + $0xb8] sm:$0xff]
    %v184 = vld [vmem:[#allocation6 + $0xc0] sm:$0xff]
    %v185 = vld [vmem:[#allocation6 + $0xc8] sm:$0xff]
    %v186 = vld [vmem:[#allocation6 + $0xd0] sm:$0xff]
    %v187 = vld [vmem:[#allocation6 + $0xd8] sm:$0xff]
    %v188 = vld [vmem:[#allocation6 + $0xe0] sm:$0xff]
    %v189 = vld [vmem:[#allocation6 + $0xe8] sm:$0xff]
    %v190 = vld [vmem:[#allocation6 + $0xf0] sm:$0xff]
    %v191 = vld [vmem:[#allocation6 + $0xf8] sm:$0xff]
    %192 = vmatpush.msra.mxu0 %v190
    %193 = vmatpush.msra.mxu0 %v188
    %194 = vmatpush.msra.mxu0 %v186
    %195 = vmatpush.msra.mxu0 %v184
    %196 = vmatpush.msra.mxu0 %v182
    %197 = vmatpush.msra.mxu0 %v180
    %198 = vmatpush.msra.mxu0 %v178
    %199 = vmatpush.msra.mxu0 %v176
    %200 = vmatpush.msra.mxu0 %v174
    %201 = vmatpush.msra.mxu0 %v172
    %202 = vmatpush.msra.mxu0 %v170
    %203 = vmatpush.msra.mxu0 %v168
    %204 = vmatpush.msra.mxu0 %v166
    %205 = vmatpush.msra.mxu0 %v164
    %206 = vmatpush.msra.mxu0 %v162
    %207 = vmatpush.msra.mxu0 %v160
    %208 = vmatmul.f32.gmra.mxu0 %v128
    %v209 = vpop.f32.mrf.mxu0
    %v210 = vadd.f32 0.0, %v209
    %211 = vmatmul.f32.gmra.mxu0 %v129
    %v212 = vpop.f32.mrf.mxu0
    %v213 = vadd.f32 0.0, %v212
    %214 = vmatmul.f32.gmra.mxu0 %v130
    %v215 = vpop.f32.mrf.mxu0
    %v216 = vadd.f32 0.0, %v215
    %217 = vmatmul.f32.gmra.mxu0 %v131
    %v218 = vpop.f32.mrf.mxu0
    %v219 = vadd.f32 0.0, %v218
    %220 = vmatmul.f32.gmra.mxu0 %v132
    %v221 = vpop.f32.mrf.mxu0
    %v222 = vadd.f32 0.0, %v221
    %223 = vmatmul.f32.gmra.mxu0 %v133
    %v224 = vpop.f32.mrf.mxu0
    %v225 = vadd.f32 0.0, %v224
    %226 = vmatmul.f32.gmra.mxu0 %v134
    %v227 = vpop.f32.mrf.mxu0
    %v228 = vadd.f32 0.0, %v227
    %229 = vmatmul.f32.gmra.mxu0 %v135
    %v230 = vpop.f32.mrf.mxu0
    %v231 = vadd.f32 0.0, %v230
    %232 = vmatmul.f32.gmra.mxu0 %v136
    %v233 = vpop.f32.mrf.mxu0
    %v234 = vadd.f32 0.0, %v233
    %235 = vmatmul.f32.gmra.mxu0 %v137
    %v236 = vpop.f32.mrf.mxu0
    %v237 = vadd.f32 0.0, %v236
    %238 = vmatmul.f32.gmra.mxu0 %v138
    %v239 = vpop.f32.mrf.mxu0
    %v240 = vadd.f32 0.0, %v239
    %241 = vmatmul.f32.gmra.mxu0 %v139
    %v242 = vpop.f32.mrf.mxu0
    %v243 = vadd.f32 0.0, %v242
    %244 = vmatmul.f32.gmra.mxu0 %v140
    %v245 = vpop.f32.mrf.mxu0
    %v246 = vadd.f32 0.0, %v245
    %247 = vmatmul.f32.gmra.mxu0 %v141
    %v248 = vpop.f32.mrf.mxu0
    %v249 = vadd.f32 0.0, %v248
    %250 = vmatmul.f32.gmra.mxu0 %v142
    %v251 = vpop.f32.mrf.mxu0
    %v252 = vadd.f32 0.0, %v251
    %253 = vmatmul.f32.gmra.mxu0 %v143
    %v254 = vpop.f32.mrf.mxu0
    %v255 = vadd.f32 0.0, %v254
    %256 = vmatmul.f32.gmra.mxu0 %v144
    %v257 = vpop.f32.mrf.mxu0
    %v258 = vadd.f32 0.0, %v257
    %259 = vmatmul.f32.gmra.mxu0 %v145
    %v260 = vpop.f32.mrf.mxu0
    %v261 = vadd.f32 0.0, %v260
    %262 = vmatmul.f32.gmra.mxu0 %v146
    %v263 = vpop.f32.mrf.mxu0
    %v264 = vadd.f32 0.0, %v263
    %265 = vmatmul.f32.gmra.mxu0 %v147
    %v266 = vpop.f32.mrf.mxu0
    %v267 = vadd.f32 0.0, %v266
    %268 = vmatmul.f32.gmra.mxu0 %v148
    %v269 = vpop.f32.mrf.mxu0
    %v270 = vadd.f32 0.0, %v269
    %271 = vmatmul.f32.gmra.mxu0 %v149
    %v272 = vpop.f32.mrf.mxu0
    %v273 = vadd.f32 0.0, %v272
    %274 = vmatmul.f32.gmra.mxu0 %v150
    %v275 = vpop.f32.mrf.mxu0
    %v276 = vadd.f32 0.0, %v275
    %277 = vmatmul.f32.gmra.mxu0 %v151
    %v278 = vpop.f32.mrf.mxu0
    %v279 = vadd.f32 0.0, %v278
    %280 = vmatmul.f32.gmra.mxu0 %v152
    %v281 = vpop.f32.mrf.mxu0
    %v282 = vadd.f32 0.0, %v281
    %283 = vmatmul.f32.gmra.mxu0 %v153
    %v284 = vpop.f32.mrf.mxu0
    %v285 = vadd.f32 0.0, %v284
    %286 = vmatmul.f32.gmra.mxu0 %v154
    %v287 = vpop.f32.mrf.mxu0
    %v288 = vadd.f32 0.0, %v287
    %289 = vmatmul.f32.gmra.mxu0 %v155
    %v290 = vpop.f32.mrf.mxu0
    %v291 = vadd.f32 0.0, %v290
    %292 = vmatmul.f32.gmra.mxu0 %v156
    %v293 = vpop.f32.mrf.mxu0
    %v294 = vadd.f32 0.0, %v293
    %295 = vmatmul.f32.gmra.mxu0 %v157
    %v296 = vpop.f32.mrf.mxu0
    %v297 = vadd.f32 0.0, %v296
    %298 = vmatmul.f32.gmra.mxu0 %v158
    %v299 = vpop.f32.mrf.mxu0
    %v300 = vadd.f32 0.0, %v299
    %301 = vmatmul.f32.gmra.mxu0 %v159
    %v302 = vpop.f32.mrf.mxu0
    %v303 = vadd.f32 0.0, %v302
    %304 = vdwg.mxu0
    %305 = vmatpush.msra.mxu0 %v191
    %306 = vmatpush.msra.mxu0 %v189
    %307 = vmatpush.msra.mxu0 %v187
    %308 = vmatpush.msra.mxu0 %v185
    %309 = vmatpush.msra.mxu0 %v183
    %310 = vmatpush.msra.mxu0 %v181
    %311 = vmatpush.msra.mxu0 %v179
    %312 = vmatpush.msra.mxu0 %v177
    %313 = vmatpush.msra.mxu0 %v175
    %314 = vmatpush.msra.mxu0 %v173
    %315 = vmatpush.msra.mxu0 %v171
    %316 = vmatpush.msra.mxu0 %v169
    %317 = vmatpush.msra.mxu0 %v167
    %318 = vmatpush.msra.mxu0 %v165
    %319 = vmatpush.msra.mxu0 %v163
    %320 = vmatpush.msra.mxu0 %v161
    %321 = vmatmul.f32.gmra.mxu0 %v128
    %v322 = vpop.f32.mrf.mxu0
    %v323 = vadd.f32 0.0, %v322
    %324 = vmatmul.f32.gmra.mxu0 %v129
    %v325 = vpop.f32.mrf.mxu0
    %v326 = vadd.f32 0.0, %v325
    %327 = vmatmul.f32.gmra.mxu0 %v130
    %v328 = vpop.f32.mrf.mxu0
    %v329 = vadd.f32 0.0, %v328
    %330 = vmatmul.f32.gmra.mxu0 %v131
    %v331 = vpop.f32.mrf.mxu0
    %v332 = vadd.f32 0.0, %v331
    %333 = vmatmul.f32.gmra.mxu0 %v132
    %v334 = vpop.f32.mrf.mxu0
    %v335 = vadd.f32 0.0, %v334
    %336 = vmatmul.f32.gmra.mxu0 %v133
    %v337 = vpop.f32.mrf.mxu0
    %v338 = vadd.f32 0.0, %v337
    %339 = vmatmul.f32.gmra.mxu0 %v134
    %v340 = vpop.f32.mrf.mxu0
    %v341 = vadd.f32 0.0, %v340
    %342 = vmatmul.f32.gmra.mxu0 %v135
    %v343 = vpop.f32.mrf.mxu0
    %v344 = vadd.f32 0.0, %v343
    %345 = vmatmul.f32.gmra.mxu0 %v136
    %v346 = vpop.f32.mrf.mxu0
    %v347 = vadd.f32 0.0, %v346
    %348 = vmatmul.f32.gmra.mxu0 %v137
    %v349 = vpop.f32.mrf.mxu0
    %v350 = vadd.f32 0.0, %v349
    %351 = vmatmul.f32.gmra.mxu0 %v138
    %v352 = vpop.f32.mrf.mxu0
    %v353 = vadd.f32 0.0, %v352
    %354 = vmatmul.f32.gmra.mxu0 %v139
    %v355 = vpop.f32.mrf.mxu0
    %v356 = vadd.f32 0.0, %v355
    %357 = vmatmul.f32.gmra.mxu0 %v140
    %v358 = vpop.f32.mrf.mxu0
    %v359 = vadd.f32 0.0, %v358
    %360 = vmatmul.f32.gmra.mxu0 %v141
    %v361 = vpop.f32.mrf.mxu0
    %v362 = vadd.f32 0.0, %v361
    %363 = vmatmul.f32.gmra.mxu0 %v142
    %v364 = vpop.f32.mrf.mxu0
    %v365 = vadd.f32 0.0, %v364
    %366 = vmatmul.f32.gmra.mxu0 %v143
    %v367 = vpop.f32.mrf.mxu0
    %v368 = vadd.f32 0.0, %v367
    %369 = vmatmul.f32.gmra.mxu0 %v144
    %v370 = vpop.f32.mrf.mxu0
    %v371 = vadd.f32 0.0, %v370
    %372 = vmatmul.f32.gmra.mxu0 %v145
    %v373 = vpop.f32.mrf.mxu0
    %v374 = vadd.f32 0.0, %v373
    %375 = vmatmul.f32.gmra.mxu0 %v146
    %v376 = vpop.f32.mrf.mxu0
    %v377 = vadd.f32 0.0, %v376
    %378 = vmatmul.f32.gmra.mxu0 %v147
    %v379 = vpop.f32.mrf.mxu0
    %v380 = vadd.f32 0.0, %v379
    %381 = vmatmul.f32.gmra.mxu0 %v148
    %v382 = vpop.f32.mrf.mxu0
    %v383 = vadd.f32 0.0, %v382
    %384 = vmatmul.f32.gmra.mxu0 %v149
    %v385 = vpop.f32.mrf.mxu0
    %v386 = vadd.f32 0.0, %v385
    %387 = vmatmul.f32.gmra.mxu0 %v150
    %v388 = vpop.f32.mrf.mxu0
    %v389 = vadd.f32 0.0, %v388
    %390 = vmatmul.f32.gmra.mxu0 %v151
    %v391 = vpop.f32.mrf.mxu0
    %v392 = vadd.f32 0.0, %v391
    %393 = vmatmul.f32.gmra.mxu0 %v152
    %v394 = vpop.f32.mrf.mxu0
    %v395 = vadd.f32 0.0, %v394
    %396 = vmatmul.f32.gmra.mxu0 %v153
    %v397 = vpop.f32.mrf.mxu0
    %v398 = vadd.f32 0.0, %v397
    %399 = vmatmul.f32.gmra.mxu0 %v154
    %v400 = vpop.f32.mrf.mxu0
    %v401 = vadd.f32 0.0, %v400
    %402 = vmatmul.f32.gmra.mxu0 %v155
    %v403 = vpop.f32.mrf.mxu0
    %v404 = vadd.f32 0.0, %v403
    %405 = vmatmul.f32.gmra.mxu0 %v156
    %v406 = vpop.f32.mrf.mxu0
    %v407 = vadd.f32 0.0, %v406
    %408 = vmatmul.f32.gmra.mxu0 %v157
    %v409 = vpop.f32.mrf.mxu0
    %v410 = vadd.f32 0.0, %v409
    %411 = vmatmul.f32.gmra.mxu0 %v158
    %v412 = vpop.f32.mrf.mxu0
    %v413 = vadd.f32 0.0, %v412
    %414 = vmatmul.f32.gmra.mxu0 %v159
    %v415 = vpop.f32.mrf.mxu0
    %v416 = vadd.f32 0.0, %v415
    %417 = vdwg.mxu0
    %v418 = vmul.f32 %v210, 5.0
    %v419 = vmul.f32 %v323, 5.0
    %v420 = vmul.f32 %v213, 5.0
    %v421 = vmul.f32 %v326, 5.0
    %v422 = vmul.f32 %v216, 5.0
    %v423 = vmul.f32 %v329, 5.0
    %v424 = vmul.f32 %v219, 5.0
    %v425 = vmul.f32 %v332, 5.0
    %v426 = vmul.f32 %v222, 5.0
    %v427 = vmul.f32 %v335, 5.0
    %v428 = vmul.f32 %v225, 5.0
    %v429 = vmul.f32 %v338, 5.0
    %v430 = vmul.f32 %v228, 5.0
    %v431 = vmul.f32 %v341, 5.0
    %v432 = vmul.f32 %v231, 5.0
    %v433 = vmul.f32 %v344, 5.0
    %v434 = vmul.f32 %v234, 5.0
    %v435 = vmul.f32 %v347, 5.0
    %v436 = vmul.f32 %v237, 5.0
    %v437 = vmul.f32 %v350, 5.0
    %v438 = vmul.f32 %v240, 5.0
    %v439 = vmul.f32 %v353, 5.0
    %v440 = vmul.f32 %v243, 5.0
    %v441 = vmul.f32 %v356, 5.0
    %v442 = vmul.f32 %v246, 5.0
    %v443 = vmul.f32 %v359, 5.0
    %v444 = vmul.f32 %v249, 5.0
    %v445 = vmul.f32 %v362, 5.0
    %v446 = vmul.f32 %v252, 5.0
    %v447 = vmul.f32 %v365, 5.0
    %v448 = vmul.f32 %v255, 5.0
    %v449 = vmul.f32 %v368, 5.0
    %v450 = vmul.f32 %v258, 5.0
    %v451 = vmul.f32 %v371, 5.0
    %v452 = vmul.f32 %v261, 5.0
    %v453 = vmul.f32 %v374, 5.0
    %v454 = vmul.f32 %v264, 5.0
    %v455 = vmul.f32 %v377, 5.0
    %v456 = vmul.f32 %v267, 5.0
    %v457 = vmul.f32 %v380, 5.0
    %v458 = vmul.f32 %v270, 5.0
    %v459 = vmul.f32 %v383, 5.0
    %v460 = vmul.f32 %v273, 5.0
    %v461 = vmul.f32 %v386, 5.0
    %v462 = vmul.f32 %v276, 5.0
    %v463 = vmul.f32 %v389, 5.0
    %v464 = vmul.f32 %v279, 5.0
    %v465 = vmul.f32 %v392, 5.0
    %v466 = vmul.f32 %v282, 5.0
    %v467 = vmul.f32 %v395, 5.0
    %v468 = vmul.f32 %v285, 5.0
    %v469 = vmul.f32 %v398, 5.0
    %v470 = vmul.f32 %v288, 5.0
    %v471 = vmul.f32 %v401, 5.0
    %v472 = vmul.f32 %v291, 5.0
    %v473 = vmul.f32 %v404, 5.0
    %v474 = vmul.f32 %v294, 5.0
    %v475 = vmul.f32 %v407, 5.0
    %v476 = vmul.f32 %v297, 5.0
    %v477 = vmul.f32 %v410, 5.0
    %v478 = vmul.f32 %v300, 5.0
    %v479 = vmul.f32 %v413, 5.0
    %v480 = vmul.f32 %v303, 5.0
    %v481 = vmul.f32 %v416, 5.0
    %v482 = vld [vmem:[#allocation8] sm:$0x3]
    %v484 = vperm.slane %v482, 0
    %v485 = vperm.slane %v482, 1
    %v488 = vadd.f32 %v418, %v484
    %v489 = vadd.f32 %v419, %v485
    %v490 = vadd.f32 %v420, %v484
    %v491 = vadd.f32 %v421, %v485
    %v492 = vadd.f32 %v422, %v484
    %v493 = vadd.f32 %v423, %v485
    %v494 = vadd.f32 %v424, %v484
    %v495 = vadd.f32 %v425, %v485
    %v496 = vadd.f32 %v426, %v484
    %v497 = vadd.f32 %v427, %v485
    %v498 = vadd.f32 %v428, %v484
    %v499 = vadd.f32 %v429, %v485
    %v500 = vadd.f32 %v430, %v484
    %v501 = vadd.f32 %v431, %v485
    %v502 = vadd.f32 %v432, %v484
    %v503 = vadd.f32 %v433, %v485
    %v504 = vadd.f32 %v434, %v484
    %v505 = vadd.f32 %v435, %v485
    %v506 = vadd.f32 %v436, %v484
    %v507 = vadd.f32 %v437, %v485
    %v508 = vadd.f32 %v438, %v484
    %v509 = vadd.f32 %v439, %v485
    %v510 = vadd.f32 %v440, %v484
    %v511 = vadd.f32 %v441, %v485
    %v512 = vadd.f32 %v442, %v484
    %v513 = vadd.f32 %v443, %v485
    %v514 = vadd.f32 %v444, %v484
    %v515 = vadd.f32 %v445, %v485
    %v516 = vadd.f32 %v446, %v484
    %v517 = vadd.f32 %v447, %v485
    %v518 = vadd.f32 %v448, %v484
    %v519 = vadd.f32 %v449, %v485
    %v520 = vadd.f32 %v450, %v484
    %v521 = vadd.f32 %v451, %v485
    %v522 = vadd.f32 %v452, %v484
    %v523 = vadd.f32 %v453, %v485
    %v524 = vadd.f32 %v454, %v484
    %v525 = vadd.f32 %v455, %v485
    %v526 = vadd.f32 %v456, %v484
    %v527 = vadd.f32 %v457, %v485
    %v528 = vadd.f32 %v458, %v484
    %v529 = vadd.f32 %v459, %v485
    %v530 = vadd.f32 %v460, %v484
    %v531 = vadd.f32 %v461, %v485
    %v532 = vadd.f32 %v462, %v484
    %v533 = vadd.f32 %v463, %v485
    %v534 = vadd.f32 %v464, %v484
    %v535 = vadd.f32 %v465, %v485
    %v536 = vadd.f32 %v466, %v484
    %v537 = vadd.f32 %v467, %v485
    %v538 = vadd.f32 %v468, %v484
    %v539 = vadd.f32 %v469, %v485
    %v540 = vadd.f32 %v470, %v484
    %v541 = vadd.f32 %v471, %v485
    %v542 = vadd.f32 %v472, %v484
    %v543 = vadd.f32 %v473, %v485
    %v544 = vadd.f32 %v474, %v484
    %v545 = vadd.f32 %v475, %v485
    %v546 = vadd.f32 %v476, %v484
    %v547 = vadd.f32 %v477, %v485
    %v548 = vadd.f32 %v478, %v484
    %v549 = vadd.f32 %v479, %v485
    %v550 = vadd.f32 %v480, %v484
    %v551 = vadd.f32 %v481, %v485
    %v552 = vld [vmem:[#allocation2] sm:$0xff]
    %v553 = vld [vmem:[#allocation2 + $0x8] sm:$0xff]
    %v554 = vld [vmem:[#allocation2 + $0x10] sm:$0xff]
    %v555 = vld [vmem:[#allocation2 + $0x18] sm:$0xff]
    %v556 = vld [vmem:[#allocation2 + $0x20] sm:$0xff]
    %v557 = vld [vmem:[#allocation2 + $0x28] sm:$0xff]
    %v558 = vld [vmem:[#allocation2 + $0x30] sm:$0xff]
    %v559 = vld [vmem:[#allocation2 + $0x38] sm:$0xff]
    %v560 = vld [vmem:[#allocation2 + $0x40] sm:$0xff]
    %v561 = vld [vmem:[#allocation2 + $0x48] sm:$0xff]
    %v562 = vld [vmem:[#allocation2 + $0x50] sm:$0xff]
    %v563 = vld [vmem:[#allocation2 + $0x58] sm:$0xff]
    %v564 = vld [vmem:[#allocation2 + $0x60] sm:$0xff]
    %v565 = vld [vmem:[#allocation2 + $0x68] sm:$0xff]
    %v566 = vld [vmem:[#allocation2 + $0x70] sm:$0xff]
    %v567 = vld [vmem:[#allocation2 + $0x78] sm:$0xff]
    %v568 = vld [vmem:[#allocation2 + $0x80] sm:$0xff]
    %v569 = vld [vmem:[#allocation2 + $0x88] sm:$0xff]
    %v570 = vld [vmem:[#allocation2 + $0x90] sm:$0xff]
    %v571 = vld [vmem:[#allocation2 + $0x98] sm:$0xff]
    %v572 = vld [vmem:[#allocation2 + $0xa0] sm:$0xff]
    %v573 = vld [vmem:[#allocation2 + $0xa8] sm:$0xff]
    %v574 = vld [vmem:[#allocation2 + $0xb0] sm:$0xff]
    %v575 = vld [vmem:[#allocation2 + $0xb8] sm:$0xff]
    %v576 = vld [vmem:[#allocation2 + $0xc0] sm:$0xff]
    %v577 = vld [vmem:[#allocation2 + $0xc8] sm:$0xff]
    %v578 = vld [vmem:[#allocation2 + $0xd0] sm:$0xff]
    %v579 = vld [vmem:[#allocation2 + $0xd8] sm:$0xff]
    %v580 = vld [vmem:[#allocation2 + $0xe0] sm:$0xff]
    %v581 = vld [vmem:[#allocation2 + $0xe8] sm:$0xff]
    %v582 = vld [vmem:[#allocation2 + $0xf0] sm:$0xff]
    %v583 = vld [vmem:[#allocation2 + $0xf8] sm:$0xff]
    %v584 = vmax.f32 %v488, %v489
    %585 = vmax.xlane.f32.xlu0 %v584
    %v586 = vpop.xlane.xlu0 %585
    %v587 = vmax.f32 %v490, %v491
    %588 = vmax.xlane.f32.xlu0 %v587
    %v589 = vpop.xlane.xlu0 %588
    %v590 = vmax.f32 %v492, %v493
    %591 = vmax.xlane.f32.xlu0 %v590
    %v592 = vpop.xlane.xlu0 %591
    %v593 = vmax.f32 %v494, %v495
    %594 = vmax.xlane.f32.xlu0 %v593
    %v595 = vpop.xlane.xlu0 %594
    %v596 = vmax.f32 %v496, %v497
    %597 = vmax.xlane.f32.xlu0 %v596
    %v598 = vpop.xlane.xlu0 %597
    %v599 = vmax.f32 %v498, %v499
    %600 = vmax.xlane.f32.xlu0 %v599
    %v601 = vpop.xlane.xlu0 %600
    %v602 = vmax.f32 %v500, %v501
    %603 = vmax.xlane.f32.xlu0 %v602
    %v604 = vpop.xlane.xlu0 %603
    %v605 = vmax.f32 %v502, %v503
    %606 = vmax.xlane.f32.xlu0 %v605
    %v607 = vpop.xlane.xlu0 %606
    %v608 = vmax.f32 %v504, %v505
    %609 = vmax.xlane.f32.xlu0 %v608
    %v610 = vpop.xlane.xlu0 %609
    %v611 = vmax.f32 %v506, %v507
    %612 = vmax.xlane.f32.xlu0 %v611
    %v613 = vpop.xlane.xlu0 %612
    %v614 = vmax.f32 %v508, %v509
    %615 = vmax.xlane.f32.xlu0 %v614
    %v616 = vpop.xlane.xlu0 %615
    %v617 = vmax.f32 %v510, %v511
    %618 = vmax.xlane.f32.xlu0 %v617
    %v619 = vpop.xlane.xlu0 %618
    %v620 = vmax.f32 %v512, %v513
    %621 = vmax.xlane.f32.xlu0 %v620
    %v622 = vpop.xlane.xlu0 %621
    %v623 = vmax.f32 %v514, %v515
    %624 = vmax.xlane.f32.xlu0 %v623
    %v625 = vpop.xlane.xlu0 %624
    %v626 = vmax.f32 %v516, %v517
    %627 = vmax.xlane.f32.xlu0 %v626
    %v628 = vpop.xlane.xlu0 %627
    %v629 = vmax.f32 %v518, %v519
    %630 = vmax.xlane.f32.xlu0 %v629
    %v631 = vpop.xlane.xlu0 %630
    %v632 = vmax.f32 %v520, %v521
    %633 = vmax.xlane.f32.xlu0 %v632
    %v634 = vpop.xlane.xlu0 %633
    %v635 = vmax.f32 %v522, %v523
    %636 = vmax.xlane.f32.xlu0 %v635
    %v637 = vpop.xlane.xlu0 %636
    %v638 = vmax.f32 %v524, %v525
    %639 = vmax.xlane.f32.xlu0 %v638
    %v640 = vpop.xlane.xlu0 %639
    %v641 = vmax.f32 %v526, %v527
    %642 = vmax.xlane.f32.xlu0 %v641
    %v643 = vpop.xlane.xlu0 %642
    %v644 = vmax.f32 %v528, %v529
    %645 = vmax.xlane.f32.xlu0 %v644
    %v646 = vpop.xlane.xlu0 %645
    %v647 = vmax.f32 %v530, %v531
    %648 = vmax.xlane.f32.xlu0 %v647
    %v649 = vpop.xlane.xlu0 %648
    %v650 = vmax.f32 %v532, %v533
    %651 = vmax.xlane.f32.xlu0 %v650
    %v652 = vpop.xlane.xlu0 %651
    %v653 = vmax.f32 %v534, %v535
    %654 = vmax.xlane.f32.xlu0 %v653
    %v655 = vpop.xlane.xlu0 %654
    %v656 = vmax.f32 %v536, %v537
    %657 = vmax.xlane.f32.xlu0 %v656
    %v658 = vpop.xlane.xlu0 %657
    %v659 = vmax.f32 %v538, %v539
    %660 = vmax.xlane.f32.xlu0 %v659
    %v661 = vpop.xlane.xlu0 %660
    %v662 = vmax.f32 %v540, %v541
    %663 = vmax.xlane.f32.xlu0 %v662
    %v664 = vpop.xlane.xlu0 %663
    %v665 = vmax.f32 %v542, %v543
    %666 = vmax.xlane.f32.xlu0 %v665
    %v667 = vpop.xlane.xlu0 %666
    %v668 = vmax.f32 %v544, %v545
    %669 = vmax.xlane.f32.xlu0 %v668
    %v670 = vpop.xlane.xlu0 %669
    %v671 = vmax.f32 %v546, %v547
    %672 = vmax.xlane.f32.xlu0 %v671
    %v673 = vpop.xlane.xlu0 %672
    %v674 = vmax.f32 %v548, %v549
    %675 = vmax.xlane.f32.xlu0 %v674
    %v676 = vpop.xlane.xlu0 %675
    %v677 = vmax.f32 %v550, %v551
    %678 = vmax.xlane.f32.xlu0 %v677
    %v679 = vpop.xlane.xlu0 %678
    %v680 = vmax.f32 %v552, %v586
    %v681 = vmax.f32 %v553, %v589
    %v682 = vmax.f32 %v554, %v592
    %v683 = vmax.f32 %v555, %v595
    %v684 = vmax.f32 %v556, %v598
    %v685 = vmax.f32 %v557, %v601
    %v686 = vmax.f32 %v558, %v604
    %v687 = vmax.f32 %v559, %v607
    %v688 = vmax.f32 %v560, %v610
    %v689 = vmax.f32 %v561, %v613
    %v690 = vmax.f32 %v562, %v616
    %v691 = vmax.f32 %v563, %v619
    %v692 = vmax.f32 %v564, %v622
    %v693 = vmax.f32 %v565, %v625
    %v694 = vmax.f32 %v566, %v628
    %v695 = vmax.f32 %v567, %v631
    %v696 = vmax.f32 %v568, %v634
    %v697 = vmax.f32 %v569, %v637
    %v698 = vmax.f32 %v570, %v640
    %v699 = vmax.f32 %v571, %v643
    %v700 = vmax.f32 %v572, %v646
    %v701 = vmax.f32 %v573, %v649
    %v702 = vmax.f32 %v574, %v652
    %v703 = vmax.f32 %v575, %v655
    %v704 = vmax.f32 %v576, %v658
    %v705 = vmax.f32 %v577, %v661
    %v706 = vmax.f32 %v578, %v664
    %v707 = vmax.f32 %v579, %v667
    %v708 = vmax.f32 %v580, %v670
    %v709 = vmax.f32 %v581, %v673
    %v710 = vmax.f32 %v582, %v676
    %v711 = vmax.f32 %v583, %v679
    %v712 = vld [vmem:[#allocation3] sm:$0xff]
    %v713 = vld [vmem:[#allocation3 + $0x8] sm:$0xff]
    %v714 = vld [vmem:[#allocation3 + $0x10] sm:$0xff]
    %v715 = vld [vmem:[#allocation3 + $0x18] sm:$0xff]
    %v716 = vld [vmem:[#allocation3 + $0x20] sm:$0xff]
    %v717 = vld [vmem:[#allocation3 + $0x28] sm:$0xff]
    %v718 = vld [vmem:[#allocation3 + $0x30] sm:$0xff]
    %v719 = vld [vmem:[#allocation3 + $0x38] sm:$0xff]
    %v720 = vld [vmem:[#allocation3 + $0x40] sm:$0xff]
    %v721 = vld [vmem:[#allocation3 + $0x48] sm:$0xff]
    %v722 = vld [vmem:[#allocation3 + $0x50] sm:$0xff]
    %v723 = vld [vmem:[#allocation3 + $0x58] sm:$0xff]
    %v724 = vld [vmem:[#allocation3 + $0x60] sm:$0xff]
    %v725 = vld [vmem:[#allocation3 + $0x68] sm:$0xff]
    %v726 = vld [vmem:[#allocation3 + $0x70] sm:$0xff]
    %v727 = vld [vmem:[#allocation3 + $0x78] sm:$0xff]
    %v728 = vld [vmem:[#allocation3 + $0x80] sm:$0xff]
    %v729 = vld [vmem:[#allocation3 + $0x88] sm:$0xff]
    %v730 = vld [vmem:[#allocation3 + $0x90] sm:$0xff]
    %v731 = vld [vmem:[#allocation3 + $0x98] sm:$0xff]
    %v732 = vld [vmem:[#allocation3 + $0xa0] sm:$0xff]
    %v733 = vld [vmem:[#allocation3 + $0xa8] sm:$0xff]
    %v734 = vld [vmem:[#allocation3 + $0xb0] sm:$0xff]
    %v735 = vld [vmem:[#allocation3 + $0xb8] sm:$0xff]
    %v736 = vld [vmem:[#allocation3 + $0xc0] sm:$0xff]
    %v737 = vld [vmem:[#allocation3 + $0xc8] sm:$0xff]
    %v738 = vld [vmem:[#allocation3 + $0xd0] sm:$0xff]
    %v739 = vld [vmem:[#allocation3 + $0xd8] sm:$0xff]
    %v740 = vld [vmem:[#allocation3 + $0xe0] sm:$0xff]
    %v741 = vld [vmem:[#allocation3 + $0xe8] sm:$0xff]
    %v742 = vld [vmem:[#allocation3 + $0xf0] sm:$0xff]
    %v743 = vld [vmem:[#allocation3 + $0xf8] sm:$0xff]
    %v744 = vsub.f32 %v552, %v680
    %v745 = vsub.f32 %v553, %v681
    %v746 = vsub.f32 %v554, %v682
    %v747 = vsub.f32 %v555, %v683
    %v748 = vsub.f32 %v556, %v684
    %v749 = vsub.f32 %v557, %v685
    %v750 = vsub.f32 %v558, %v686
    %v751 = vsub.f32 %v559, %v687
    %v752 = vsub.f32 %v560, %v688
    %v753 = vsub.f32 %v561, %v689
    %v754 = vsub.f32 %v562, %v690
    %v755 = vsub.f32 %v563, %v691
    %v756 = vsub.f32 %v564, %v692
    %v757 = vsub.f32 %v565, %v693
    %v758 = vsub.f32 %v566, %v694
    %v759 = vsub.f32 %v567, %v695
    %v760 = vsub.f32 %v568, %v696
    %v761 = vsub.f32 %v569, %v697
    %v762 = vsub.f32 %v570, %v698
    %v763 = vsub.f32 %v571, %v699
    %v764 = vsub.f32 %v572, %v700
    %v765 = vsub.f32 %v573, %v701
    %v766 = vsub.f32 %v574, %v702
    %v767 = vsub.f32 %v575, %v703
    %v768 = vsub.f32 %v576, %v704
    %v769 = vsub.f32 %v577, %v705
    %v770 = vsub.f32 %v578, %v706
    %v771 = vsub.f32 %v579, %v707
    %v772 = vsub.f32 %v580, %v708
    %v773 = vsub.f32 %v581, %v709
    %v774 = vsub.f32 %v582, %v710
    %v775 = vsub.f32 %v583, %v711
    %v776 = vmul.f32 %v744, 1.442695
    %v777 = vpow.pop %v776
    %v778 = vmul.f32 %v745, 1.442695
    %v779 = vpow.pop %v778
    %v780 = vmul.f32 %v746, 1.442695
    %v781 = vpow.pop %v780
    %v782 = vmul.f32 %v747, 1.442695
    %v783 = vpow.pop %v782
    %v784 = vmul.f32 %v748, 1.442695
    %v785 = vpow.pop %v784
    %v786 = vmul.f32 %v749, 1.442695
    %v787 = vpow.pop %v786
    %v788 = vmul.f32 %v750, 1.442695
    %v789 = vpow.pop %v788
    %v790 = vmul.f32 %v751, 1.442695
    %v791 = vpow.pop %v790
    %v792 = vmul.f32 %v752, 1.442695
    %v793 = vpow.pop %v792
    %v794 = vmul.f32 %v753, 1.442695
    %v795 = vpow.pop %v794
    %v796 = vmul.f32 %v754, 1.442695
    %v797 = vpow.pop %v796
    %v798 = vmul.f32 %v755, 1.442695
    %v799 = vpow.pop %v798
    %v800 = vmul.f32 %v756, 1.442695
    %v801 = vpow.pop %v800
    %v802 = vmul.f32 %v757, 1.442695
    %v803 = vpow.pop %v802
    %v804 = vmul.f32 %v758, 1.442695
    %v805 = vpow.pop %v804
    %v806 = vmul.f32 %v759, 1.442695
    %v807 = vpow.pop %v806
    %v808 = vmul.f32 %v760, 1.442695
    %v809 = vpow.pop %v808
    %v810 = vmul.f32 %v761, 1.442695
    %v811 = vpow.pop %v810
    %v812 = vmul.f32 %v762, 1.442695
    %v813 = vpow.pop %v812
    %v814 = vmul.f32 %v763, 1.442695
    %v815 = vpow.pop %v814
    %v816 = vmul.f32 %v764, 1.442695
    %v817 = vpow.pop %v816
    %v818 = vmul.f32 %v765, 1.442695
    %v819 = vpow.pop %v818
    %v820 = vmul.f32 %v766, 1.442695
    %v821 = vpow.pop %v820
    %v822 = vmul.f32 %v767, 1.442695
    %v823 = vpow.pop %v822
    %v824 = vmul.f32 %v768, 1.442695
    %v825 = vpow.pop %v824
    %v826 = vmul.f32 %v769, 1.442695
    %v827 = vpow.pop %v826
    %v828 = vmul.f32 %v770, 1.442695
    %v829 = vpow.pop %v828
    %v830 = vmul.f32 %v771, 1.442695
    %v831 = vpow.pop %v830
    %v832 = vmul.f32 %v772, 1.442695
    %v833 = vpow.pop %v832
    %v834 = vmul.f32 %v773, 1.442695
    %v835 = vpow.pop %v834
    %v836 = vmul.f32 %v774, 1.442695
    %v837 = vpow.pop %v836
    %v838 = vmul.f32 %v775, 1.442695
    %v839 = vpow.pop %v838
    %v840 = vmul.f32 %v712, %v777
    %v841 = vmul.f32 %v713, %v779
    %v842 = vmul.f32 %v714, %v781
    %v843 = vmul.f32 %v715, %v783
    %v844 = vmul.f32 %v716, %v785
    %v845 = vmul.f32 %v717, %v787
    %v846 = vmul.f32 %v718, %v789
    %v847 = vmul.f32 %v719, %v791
    %v848 = vmul.f32 %v720, %v793
    %v849 = vmul.f32 %v721, %v795
    %v850 = vmul.f32 %v722, %v797
    %v851 = vmul.f32 %v723, %v799
    %v852 = vmul.f32 %v724, %v801
    %v853 = vmul.f32 %v725, %v803
    %v854 = vmul.f32 %v726, %v805
    %v855 = vmul.f32 %v727, %v807
    %v856 = vmul.f32 %v728, %v809
    %v857 = vmul.f32 %v729, %v811
    %v858 = vmul.f32 %v730, %v813
    %v859 = vmul.f32 %v731, %v815
    %v860 = vmul.f32 %v732, %v817
    %v861 = vmul.f32 %v733, %v819
    %v862 = vmul.f32 %v734, %v821
    %v863 = vmul.f32 %v735, %v823
    %v864 = vmul.f32 %v736, %v825
    %v865 = vmul.f32 %v737, %v827
    %v866 = vmul.f32 %v738, %v829
    %v867 = vmul.f32 %v739, %v831
    %v868 = vmul.f32 %v740, %v833
    %v869 = vmul.f32 %v741, %v835
    %v870 = vmul.f32 %v742, %v837
    %v871 = vmul.f32 %v743, %v839
    %873 = vset.pattern.permute.xlu0 0
    %874 = vperm.xlu0 %873, %v680
    %v875 = vpop.permute.xlu0 %874
    %878 = vset.pattern.permute.xlu0 0
    %879 = vperm.xlu0 %878, %v681
    %v880 = vpop.permute.xlu0 %879
    %883 = vset.pattern.permute.xlu0 0
    %884 = vperm.xlu0 %883, %v682
    %v885 = vpop.permute.xlu0 %884
    %888 = vset.pattern.permute.xlu0 0
    %889 = vperm.xlu0 %888, %v683
    %v890 = vpop.permute.xlu0 %889
    %893 = vset.pattern.permute.xlu0 0
    %894 = vperm.xlu0 %893, %v684
    %v895 = vpop.permute.xlu0 %894
    %898 = vset.pattern.permute.xlu0 0
    %899 = vperm.xlu0 %898, %v685
    %v900 = vpop.permute.xlu0 %899
    %903 = vset.pattern.permute.xlu0 0
    %904 = vperm.xlu0 %903, %v686
    %v905 = vpop.permute.xlu0 %904
    %908 = vset.pattern.permute.xlu0 0
    %909 = vperm.xlu0 %908, %v687
    %v910 = vpop.permute.xlu0 %909
    %913 = vset.pattern.permute.xlu0 0
    %914 = vperm.xlu0 %913, %v688
    %v915 = vpop.permute.xlu0 %914
    %918 = vset.pattern.permute.xlu0 0
    %919 = vperm.xlu0 %918, %v689
    %v920 = vpop.permute.xlu0 %919
    %923 = vset.pattern.permute.xlu0 0
    %924 = vperm.xlu0 %923, %v690
    %v925 = vpop.permute.xlu0 %924
    %928 = vset.pattern.permute.xlu0 0
    %929 = vperm.xlu0 %928, %v691
    %v930 = vpop.permute.xlu0 %929
    %933 = vset.pattern.permute.xlu0 0
    %934 = vperm.xlu0 %933, %v692
    %v935 = vpop.permute.xlu0 %934
    %938 = vset.pattern.permute.xlu0 0
    %939 = vperm.xlu0 %938, %v693
    %v940 = vpop.permute.xlu0 %939
    %943 = vset.pattern.permute.xlu0 0
    %944 = vperm.xlu0 %943, %v694
    %v945 = vpop.permute.xlu0 %944
    %948 = vset.pattern.permute.xlu0 0
    %949 = vperm.xlu0 %948, %v695
    %v950 = vpop.permute.xlu0 %949
    %953 = vset.pattern.permute.xlu0 0
    %954 = vperm.xlu0 %953, %v696
    %v955 = vpop.permute.xlu0 %954
    %958 = vset.pattern.permute.xlu0 0
    %959 = vperm.xlu0 %958, %v697
    %v960 = vpop.permute.xlu0 %959
    %963 = vset.pattern.permute.xlu0 0
    %964 = vperm.xlu0 %963, %v698
    %v965 = vpop.permute.xlu0 %964
    %968 = vset.pattern.permute.xlu0 0
    %969 = vperm.xlu0 %968, %v699
    %v970 = vpop.permute.xlu0 %969
    %973 = vset.pattern.permute.xlu0 0
    %974 = vperm.xlu0 %973, %v700
    %v975 = vpop.permute.xlu0 %974
    %978 = vset.pattern.permute.xlu0 0
    %979 = vperm.xlu0 %978, %v701
    %v980 = vpop.permute.xlu0 %979
    %983 = vset.pattern.permute.xlu0 0
    %984 = vperm.xlu0 %983, %v702
    %v985 = vpop.permute.xlu0 %984
    %988 = vset.pattern.permute.xlu0 0
    %989 = vperm.xlu0 %988, %v703
    %v990 = vpop.permute.xlu0 %989
    %993 = vset.pattern.permute.xlu0 0
    %994 = vperm.xlu0 %993, %v704
    %v995 = vpop.permute.xlu0 %994
    %998 = vset.pattern.permute.xlu0 0
    %999 = vperm.xlu0 %998, %v705
    %v1000 = vpop.permute.xlu0 %999
    %1003 = vset.pattern.permute.xlu0 0
    %1004 = vperm.xlu0 %1003, %v706
    %v1005 = vpop.permute.xlu0 %1004
    %1008 = vset.pattern.permute.xlu0 0
    %1009 = vperm.xlu0 %1008, %v707
    %v1010 = vpop.permute.xlu0 %1009
    %1013 = vset.pattern.permute.xlu0 0
    %1014 = vperm.xlu0 %1013, %v708
    %v1015 = vpop.permute.xlu0 %1014
    %1018 = vset.pattern.permute.xlu0 0
    %1019 = vperm.xlu0 %1018, %v709
    %v1020 = vpop.permute.xlu0 %1019
    %1023 = vset.pattern.permute.xlu0 0
    %1024 = vperm.xlu0 %1023, %v710
    %v1025 = vpop.permute.xlu0 %1024
    %1028 = vset.pattern.permute.xlu0 0
    %1029 = vperm.xlu0 %1028, %v711
    %v1030 = vpop.permute.xlu0 %1029
    %v1032 = vsub.f32 %v488, %v875
    %v1033 = vsub.f32 %v489, %v875
    %v1034 = vsub.f32 %v490, %v880
    %v1035 = vsub.f32 %v491, %v880
    %v1036 = vsub.f32 %v492, %v885
    %v1037 = vsub.f32 %v493, %v885
    %v1038 = vsub.f32 %v494, %v890
    %v1039 = vsub.f32 %v495, %v890
    %v1040 = vsub.f32 %v496, %v895
    %v1041 = vsub.f32 %v497, %v895
    %v1042 = vsub.f32 %v498, %v900
    %v1043 = vsub.f32 %v499, %v900
    %v1044 = vsub.f32 %v500, %v905
    %v1045 = vsub.f32 %v501, %v905
    %v1046 = vsub.f32 %v502, %v910
    %v1047 = vsub.f32 %v503, %v910
    %v1048 = vsub.f32 %v504, %v915
    %v1049 = vsub.f32 %v505, %v915
    %v1050 = vsub.f32 %v506, %v920
    %v1051 = vsub.f32 %v507, %v920
    %v1052 = vsub.f32 %v508, %v925
    %v1053 = vsub.f32 %v509, %v925
    %v1054 = vsub.f32 %v510, %v930
    %v1055 = vsub.f32 %v511, %v930
    %v1056 = vsub.f32 %v512, %v935
    %v1057 = vsub.f32 %v513, %v935
    %v1058 = vsub.f32 %v514, %v940
    %v1059 = vsub.f32 %v515, %v940
    %v1060 = vsub.f32 %v516, %v945
    %v1061 = vsub.f32 %v517, %v945
    %v1062 = vsub.f32 %v518, %v950
    %v1063 = vsub.f32 %v519, %v950
    %v1064 = vsub.f32 %v520, %v955
    %v1065 = vsub.f32 %v521, %v955
    %v1066 = vsub.f32 %v522, %v960
    %v1067 = vsub.f32 %v523, %v960
    %v1068 = vsub.f32 %v524, %v965
    %v1069 = vsub.f32 %v525, %v965
    %v1070 = vsub.f32 %v526, %v970
    %v1071 = vsub.f32 %v527, %v970
    %v1072 = vsub.f32 %v528, %v975
    %v1073 = vsub.f32 %v529, %v975
    %v1074 = vsub.f32 %v530, %v980
    %v1075 = vsub.f32 %v531, %v980
    %v1076 = vsub.f32 %v532, %v985
    %v1077 = vsub.f32 %v533, %v985
    %v1078 = vsub.f32 %v534, %v990
    %v1079 = vsub.f32 %v535, %v990
    %v1080 = vsub.f32 %v536, %v995
    %v1081 = vsub.f32 %v537, %v995
    %v1082 = vsub.f32 %v538, %v1000
    %v1083 = vsub.f32 %v539, %v1000
    %v1084 = vsub.f32 %v540, %v1005
    %v1085 = vsub.f32 %v541, %v1005
    %v1086 = vsub.f32 %v542, %v1010
    %v1087 = vsub.f32 %v543, %v1010
    %v1088 = vsub.f32 %v544, %v1015
    %v1089 = vsub.f32 %v545, %v1015
    %v1090 = vsub.f32 %v546, %v1020
    %v1091 = vsub.f32 %v547, %v1020
    %v1092 = vsub.f32 %v548, %v1025
    %v1093 = vsub.f32 %v549, %v1025
    %v1094 = vsub.f32 %v550, %v1030
    %v1095 = vsub.f32 %v551, %v1030
    %v1096 = vmul.f32 %v1032, 1.442695
    %v1097 = vpow.pop %v1096
    %v1098 = vmul.f32 %v1033, 1.442695
    %v1099 = vpow.pop %v1098
    %v1100 = vmul.f32 %v1034, 1.442695
    %v1101 = vpow.pop %v1100
    %v1102 = vmul.f32 %v1035, 1.442695
    %v1103 = vpow.pop %v1102
    %v1104 = vmul.f32 %v1036, 1.442695
    %v1105 = vpow.pop %v1104
    %v1106 = vmul.f32 %v1037, 1.442695
    %v1107 = vpow.pop %v1106
    %v1108 = vmul.f32 %v1038, 1.442695
    %v1109 = vpow.pop %v1108
    %v1110 = vmul.f32 %v1039, 1.442695
    %v1111 = vpow.pop %v1110
    %v1112 = vmul.f32 %v1040, 1.442695
    %v1113 = vpow.pop %v1112
    %v1114 = vmul.f32 %v1041, 1.442695
    %v1115 = vpow.pop %v1114
    %v1116 = vmul.f32 %v1042, 1.442695
    %v1117 = vpow.pop %v1116
    %v1118 = vmul.f32 %v1043, 1.442695
    %v1119 = vpow.pop %v1118
    %v1120 = vmul.f32 %v1044, 1.442695
    %v1121 = vpow.pop %v1120
    %v1122 = vmul.f32 %v1045, 1.442695
    %v1123 = vpow.pop %v1122
    %v1124 = vmul.f32 %v1046, 1.442695
    %v1125 = vpow.pop %v1124
    %v1126 = vmul.f32 %v1047, 1.442695
    %v1127 = vpow.pop %v1126
    %v1128 = vmul.f32 %v1048, 1.442695
    %v1129 = vpow.pop %v1128
    %v1130 = vmul.f32 %v1049, 1.442695
    %v1131 = vpow.pop %v1130
    %v1132 = vmul.f32 %v1050, 1.442695
    %v1133 = vpow.pop %v1132
    %v1134 = vmul.f32 %v1051, 1.442695
    %v1135 = vpow.pop %v1134
    %v1136 = vmul.f32 %v1052, 1.442695
    %v1137 = vpow.pop %v1136
    %v1138 = vmul.f32 %v1053, 1.442695
    %v1139 = vpow.pop %v1138
    %v1140 = vmul.f32 %v1054, 1.442695
    %v1141 = vpow.pop %v1140
    %v1142 = vmul.f32 %v1055, 1.442695
    %v1143 = vpow.pop %v1142
    %v1144 = vmul.f32 %v1056, 1.442695
    %v1145 = vpow.pop %v1144
    %v1146 = vmul.f32 %v1057, 1.442695
    %v1147 = vpow.pop %v1146
    %v1148 = vmul.f32 %v1058, 1.442695
    %v1149 = vpow.pop %v1148
    %v1150 = vmul.f32 %v1059, 1.442695
    %v1151 = vpow.pop %v1150
    %v1152 = vmul.f32 %v1060, 1.442695
    %v1153 = vpow.pop %v1152
    %v1154 = vmul.f32 %v1061, 1.442695
    %v1155 = vpow.pop %v1154
    %v1156 = vmul.f32 %v1062, 1.442695
    %v1157 = vpow.pop %v1156
    %v1158 = vmul.f32 %v1063, 1.442695
    %v1159 = vpow.pop %v1158
    %v1160 = vmul.f32 %v1064, 1.442695
    %v1161 = vpow.pop %v1160
    %v1162 = vmul.f32 %v1065, 1.442695
    %v1163 = vpow.pop %v1162
    %v1164 = vmul.f32 %v1066, 1.442695
    %v1165 = vpow.pop %v1164
    %v1166 = vmul.f32 %v1067, 1.442695
    %v1167 = vpow.pop %v1166
    %v1168 = vmul.f32 %v1068, 1.442695
    %v1169 = vpow.pop %v1168
    %v1170 = vmul.f32 %v1069, 1.442695
    %v1171 = vpow.pop %v1170
    %v1172 = vmul.f32 %v1070, 1.442695
    %v1173 = vpow.pop %v1172
    %v1174 = vmul.f32 %v1071, 1.442695
    %v1175 = vpow.pop %v1174
    %v1176 = vmul.f32 %v1072, 1.442695
    %v1177 = vpow.pop %v1176
    %v1178 = vmul.f32 %v1073, 1.442695
    %v1179 = vpow.pop %v1178
    %v1180 = vmul.f32 %v1074, 1.442695
    %v1181 = vpow.pop %v1180
    %v1182 = vmul.f32 %v1075, 1.442695
    %v1183 = vpow.pop %v1182
    %v1184 = vmul.f32 %v1076, 1.442695
    %v1185 = vpow.pop %v1184
    %v1186 = vmul.f32 %v1077, 1.442695
    %v1187 = vpow.pop %v1186
    %v1188 = vmul.f32 %v1078, 1.442695
    %v1189 = vpow.pop %v1188
    %v1190 = vmul.f32 %v1079, 1.442695
    %v1191 = vpow.pop %v1190
    %v1192 = vmul.f32 %v1080, 1.442695
    %v1193 = vpow.pop %v1192
    %v1194 = vmul.f32 %v1081, 1.442695
    %v1195 = vpow.pop %v1194
    %v1196 = vmul.f32 %v1082, 1.442695
    %v1197 = vpow.pop %v1196
    %v1198 = vmul.f32 %v1083, 1.442695
    %v1199 = vpow.pop %v1198
    %v1200 = vmul.f32 %v1084, 1.442695
    %v1201 = vpow.pop %v1200
    %v1202 = vmul.f32 %v1085, 1.442695
    %v1203 = vpow.pop %v1202
    %v1204 = vmul.f32 %v1086, 1.442695
    %v1205 = vpow.pop %v1204
    %v1206 = vmul.f32 %v1087, 1.442695
    %v1207 = vpow.pop %v1206
    %v1208 = vmul.f32 %v1088, 1.442695
    %v1209 = vpow.pop %v1208
    %v1210 = vmul.f32 %v1089, 1.442695
    %v1211 = vpow.pop %v1210
    %v1212 = vmul.f32 %v1090, 1.442695
    %v1213 = vpow.pop %v1212
    %v1214 = vmul.f32 %v1091, 1.442695
    %v1215 = vpow.pop %v1214
    %v1216 = vmul.f32 %v1092, 1.442695
    %v1217 = vpow.pop %v1216
    %v1218 = vmul.f32 %v1093, 1.442695
    %v1219 = vpow.pop %v1218
    %v1220 = vmul.f32 %v1094, 1.442695
    %v1221 = vpow.pop %v1220
    %v1222 = vmul.f32 %v1095, 1.442695
    %v1223 = vpow.pop %v1222
    %v1224 = vadd.f32 %v1097, %v1099
    %1225 = vadd.xlane.f32.xlu0 %v1224
    %v1226 = vpop.xlane.xlu0 %1225
    %v1227 = vadd.f32 %v1101, %v1103
    %1228 = vadd.xlane.f32.xlu0 %v1227
    %v1229 = vpop.xlane.xlu0 %1228
    %v1230 = vadd.f32 %v1105, %v1107
    %1231 = vadd.xlane.f32.xlu0 %v1230
    %v1232 = vpop.xlane.xlu0 %1231
    %v1233 = vadd.f32 %v1109, %v1111
    %1234 = vadd.xlane.f32.xlu0 %v1233
    %v1235 = vpop.xlane.xlu0 %1234
    %v1236 = vadd.f32 %v1113, %v1115
    %1237 = vadd.xlane.f32.xlu0 %v1236
    %v1238 = vpop.xlane.xlu0 %1237
    %v1239 = vadd.f32 %v1117, %v1119
    %1240 = vadd.xlane.f32.xlu0 %v1239
    %v1241 = vpop.xlane.xlu0 %1240
    %v1242 = vadd.f32 %v1121, %v1123
    %1243 = vadd.xlane.f32.xlu0 %v1242
    %v1244 = vpop.xlane.xlu0 %1243
    %v1245 = vadd.f32 %v1125, %v1127
    %1246 = vadd.xlane.f32.xlu0 %v1245
    %v1247 = vpop.xlane.xlu0 %1246
    %v1248 = vadd.f32 %v1129, %v1131
    %1249 = vadd.xlane.f32.xlu0 %v1248
    %v1250 = vpop.xlane.xlu0 %1249
    %v1251 = vadd.f32 %v1133, %v1135
    %1252 = vadd.xlane.f32.xlu0 %v1251
    %v1253 = vpop.xlane.xlu0 %1252
    %v1254 = vadd.f32 %v1137, %v1139
    %1255 = vadd.xlane.f32.xlu0 %v1254
    %v1256 = vpop.xlane.xlu0 %1255
    %v1257 = vadd.f32 %v1141, %v1143
    %1258 = vadd.xlane.f32.xlu0 %v1257
    %v1259 = vpop.xlane.xlu0 %1258
    %v1260 = vadd.f32 %v1145, %v1147
    %1261 = vadd.xlane.f32.xlu0 %v1260
    %v1262 = vpop.xlane.xlu0 %1261
    %v1263 = vadd.f32 %v1149, %v1151
    %1264 = vadd.xlane.f32.xlu0 %v1263
    %v1265 = vpop.xlane.xlu0 %1264
    %v1266 = vadd.f32 %v1153, %v1155
    %1267 = vadd.xlane.f32.xlu0 %v1266
    %v1268 = vpop.xlane.xlu0 %1267
    %v1269 = vadd.f32 %v1157, %v1159
    %1270 = vadd.xlane.f32.xlu0 %v1269
    %v1271 = vpop.xlane.xlu0 %1270
    %v1272 = vadd.f32 %v1161, %v1163
    %1273 = vadd.xlane.f32.xlu0 %v1272
    %v1274 = vpop.xlane.xlu0 %1273
    %v1275 = vadd.f32 %v1165, %v1167
    %1276 = vadd.xlane.f32.xlu0 %v1275
    %v1277 = vpop.xlane.xlu0 %1276
    %v1278 = vadd.f32 %v1169, %v1171
    %1279 = vadd.xlane.f32.xlu0 %v1278
    %v1280 = vpop.xlane.xlu0 %1279
    %v1281 = vadd.f32 %v1173, %v1175
    %1282 = vadd.xlane.f32.xlu0 %v1281
    %v1283 = vpop.xlane.xlu0 %1282
    %v1284 = vadd.f32 %v1177, %v1179
    %1285 = vadd.xlane.f32.xlu0 %v1284
    %v1286 = vpop.xlane.xlu0 %1285
    %v1287 = vadd.f32 %v1181, %v1183
    %1288 = vadd.xlane.f32.xlu0 %v1287
    %v1289 = vpop.xlane.xlu0 %1288
    %v1290 = vadd.f32 %v1185, %v1187
    %1291 = vadd.xlane.f32.xlu0 %v1290
    %v1292 = vpop.xlane.xlu0 %1291
    %v1293 = vadd.f32 %v1189, %v1191
    %1294 = vadd.xlane.f32.xlu0 %v1293
    %v1295 = vpop.xlane.xlu0 %1294
    %v1296 = vadd.f32 %v1193, %v1195
    %1297 = vadd.xlane.f32.xlu0 %v1296
    %v1298 = vpop.xlane.xlu0 %1297
    %v1299 = vadd.f32 %v1197, %v1199
    %1300 = vadd.xlane.f32.xlu0 %v1299
    %v1301 = vpop.xlane.xlu0 %1300
    %v1302 = vadd.f32 %v1201, %v1203
    %1303 = vadd.xlane.f32.xlu0 %v1302
    %v1304 = vpop.xlane.xlu0 %1303
    %v1305 = vadd.f32 %v1205, %v1207
    %1306 = vadd.xlane.f32.xlu0 %v1305
    %v1307 = vpop.xlane.xlu0 %1306
    %v1308 = vadd.f32 %v1209, %v1211
    %1309 = vadd.xlane.f32.xlu0 %v1308
    %v1310 = vpop.xlane.xlu0 %1309
    %v1311 = vadd.f32 %v1213, %v1215
    %1312 = vadd.xlane.f32.xlu0 %v1311
    %v1313 = vpop.xlane.xlu0 %1312
    %v1314 = vadd.f32 %v1217, %v1219
    %1315 = vadd.xlane.f32.xlu0 %v1314
    %v1316 = vpop.xlane.xlu0 %1315
    %v1317 = vadd.f32 %v1221, %v1223
    %1318 = vadd.xlane.f32.xlu0 %v1317
    %v1319 = vpop.xlane.xlu0 %1318
    %v1320 = vadd.f32 %v840, %v1226
    %v1321 = vadd.f32 %v841, %v1229
    %v1322 = vadd.f32 %v842, %v1232
    %v1323 = vadd.f32 %v843, %v1235
    %v1324 = vadd.f32 %v844, %v1238
    %v1325 = vadd.f32 %v845, %v1241
    %v1326 = vadd.f32 %v846, %v1244
    %v1327 = vadd.f32 %v847, %v1247
    %v1328 = vadd.f32 %v848, %v1250
    %v1329 = vadd.f32 %v849, %v1253
    %v1330 = vadd.f32 %v850, %v1256
    %v1331 = vadd.f32 %v851, %v1259
    %v1332 = vadd.f32 %v852, %v1262
    %v1333 = vadd.f32 %v853, %v1265
    %v1334 = vadd.f32 %v854, %v1268
    %v1335 = vadd.f32 %v855, %v1271
    %v1336 = vadd.f32 %v856, %v1274
    %v1337 = vadd.f32 %v857, %v1277
    %v1338 = vadd.f32 %v858, %v1280
    %v1339 = vadd.f32 %v859, %v1283
    %v1340 = vadd.f32 %v860, %v1286
    %v1341 = vadd.f32 %v861, %v1289
    %v1342 = vadd.f32 %v862, %v1292
    %v1343 = vadd.f32 %v863, %v1295
    %v1344 = vadd.f32 %v864, %v1298
    %v1345 = vadd.f32 %v865, %v1301
    %v1346 = vadd.f32 %v866, %v1304
    %v1347 = vadd.f32 %v867, %v1307
    %v1348 = vadd.f32 %v868, %v1310
    %v1349 = vadd.f32 %v869, %v1313
    %v1350 = vadd.f32 %v870, %v1316
    %v1351 = vadd.f32 %v871, %v1319
    %vm1352 = vcmask 7168
    %1353 = vst.msk [vmem:[#allocation3] sm:$0xff] %vm1352, %v1320
    %1354 = vst.msk [vmem:[#allocation3 + $0x8] sm:$0xff] %vm1352, %v1321
    %1355 = vst.msk [vmem:[#allocation3 + $0x10] sm:$0xff] %vm1352, %v1322
    %1356 = vst.msk [vmem:[#allocation3 + $0x18] sm:$0xff] %vm1352, %v1323
    %1357 = vst.msk [vmem:[#allocation3 + $0x20] sm:$0xff] %vm1352, %v1324
    %1358 = vst.msk [vmem:[#allocation3 + $0x28] sm:$0xff] %vm1352, %v1325
    %1359 = vst.msk [vmem:[#allocation3 + $0x30] sm:$0xff] %vm1352, %v1326
    %1360 = vst.msk [vmem:[#allocation3 + $0x38] sm:$0xff] %vm1352, %v1327
    %1361 = vst.msk [vmem:[#allocation3 + $0x40] sm:$0xff] %vm1352, %v1328
    %1362 = vst.msk [vmem:[#allocation3 + $0x48] sm:$0xff] %vm1352, %v1329
    %1363 = vst.msk [vmem:[#allocation3 + $0x50] sm:$0xff] %vm1352, %v1330
    %1364 = vst.msk [vmem:[#allocation3 + $0x58] sm:$0xff] %vm1352, %v1331
    %1365 = vst.msk [vmem:[#allocation3 + $0x60] sm:$0xff] %vm1352, %v1332
    %1366 = vst.msk [vmem:[#allocation3 + $0x68] sm:$0xff] %vm1352, %v1333
    %1367 = vst.msk [vmem:[#allocation3 + $0x70] sm:$0xff] %vm1352, %v1334
    %1368 = vst.msk [vmem:[#allocation3 + $0x78] sm:$0xff] %vm1352, %v1335
    %1369 = vst.msk [vmem:[#allocation3 + $0x80] sm:$0xff] %vm1352, %v1336
    %1370 = vst.msk [vmem:[#allocation3 + $0x88] sm:$0xff] %vm1352, %v1337
    %1371 = vst.msk [vmem:[#allocation3 + $0x90] sm:$0xff] %vm1352, %v1338
    %1372 = vst.msk [vmem:[#allocation3 + $0x98] sm:$0xff] %vm1352, %v1339
    %1373 = vst.msk [vmem:[#allocation3 + $0xa0] sm:$0xff] %vm1352, %v1340
    %1374 = vst.msk [vmem:[#allocation3 + $0xa8] sm:$0xff] %vm1352, %v1341
    %1375 = vst.msk [vmem:[#allocation3 + $0xb0] sm:$0xff] %vm1352, %v1342
    %1376 = vst.msk [vmem:[#allocation3 + $0xb8] sm:$0xff] %vm1352, %v1343
    %1377 = vst.msk [vmem:[#allocation3 + $0xc0] sm:$0xff] %vm1352, %v1344
    %1378 = vst.msk [vmem:[#allocation3 + $0xc8] sm:$0xff] %vm1352, %v1345
    %1379 = vst.msk [vmem:[#allocation3 + $0xd0] sm:$0xff] %vm1352, %v1346
    %1380 = vst.msk [vmem:[#allocation3 + $0xd8] sm:$0xff] %vm1352, %v1347
    %1381 = vst.msk [vmem:[#allocation3 + $0xe0] sm:$0xff] %vm1352, %v1348
    %1382 = vst.msk [vmem:[#allocation3 + $0xe8] sm:$0xff] %vm1352, %v1349
    %1383 = vst.msk [vmem:[#allocation3 + $0xf0] sm:$0xff] %vm1352, %v1350
    %1384 = vst.msk [vmem:[#allocation3 + $0xf8] sm:$0xff] %vm1352, %v1351
    %1385 = vst.msk [vmem:[#allocation2] sm:$0xff] %vm1352, %v680
    %1386 = vst.msk [vmem:[#allocation2 + $0x8] sm:$0xff] %vm1352, %v681
    %1387 = vst.msk [vmem:[#allocation2 + $0x10] sm:$0xff] %vm1352, %v682
    %1388 = vst.msk [vmem:[#allocation2 + $0x18] sm:$0xff] %vm1352, %v683
    %1389 = vst.msk [vmem:[#allocation2 + $0x20] sm:$0xff] %vm1352, %v684
    %1390 = vst.msk [vmem:[#allocation2 + $0x28] sm:$0xff] %vm1352, %v685
    %1391 = vst.msk [vmem:[#allocation2 + $0x30] sm:$0xff] %vm1352, %v686
    %1392 = vst.msk [vmem:[#allocation2 + $0x38] sm:$0xff] %vm1352, %v687
    %1393 = vst.msk [vmem:[#allocation2 + $0x40] sm:$0xff] %vm1352, %v688
    %1394 = vst.msk [vmem:[#allocation2 + $0x48] sm:$0xff] %vm1352, %v689
    %1395 = vst.msk [vmem:[#allocation2 + $0x50] sm:$0xff] %vm1352, %v690
    %1396 = vst.msk [vmem:[#allocation2 + $0x58] sm:$0xff] %vm1352, %v691
    %1397 = vst.msk [vmem:[#allocation2 + $0x60] sm:$0xff] %vm1352, %v692
    %1398 = vst.msk [vmem:[#allocation2 + $0x68] sm:$0xff] %vm1352, %v693
    %1399 = vst.msk [vmem:[#allocation2 + $0x70] sm:$0xff] %vm1352, %v694
    %1400 = vst.msk [vmem:[#allocation2 + $0x78] sm:$0xff] %vm1352, %v695
    %1401 = vst.msk [vmem:[#allocation2 + $0x80] sm:$0xff] %vm1352, %v696
    %1402 = vst.msk [vmem:[#allocation2 + $0x88] sm:$0xff] %vm1352, %v697
    %1403 = vst.msk [vmem:[#allocation2 + $0x90] sm:$0xff] %vm1352, %v698
    %1404 = vst.msk [vmem:[#allocation2 + $0x98] sm:$0xff] %vm1352, %v699
    %1405 = vst.msk [vmem:[#allocation2 + $0xa0] sm:$0xff] %vm1352, %v700
    %1406 = vst.msk [vmem:[#allocation2 + $0xa8] sm:$0xff] %vm1352, %v701
    %1407 = vst.msk [vmem:[#allocation2 + $0xb0] sm:$0xff] %vm1352, %v702
    %1408 = vst.msk [vmem:[#allocation2 + $0xb8] sm:$0xff] %vm1352, %v703
    %1409 = vst.msk [vmem:[#allocation2 + $0xc0] sm:$0xff] %vm1352, %v704
    %1410 = vst.msk [vmem:[#allocation2 + $0xc8] sm:$0xff] %vm1352, %v705
    %1411 = vst.msk [vmem:[#allocation2 + $0xd0] sm:$0xff] %vm1352, %v706
    %1412 = vst.msk [vmem:[#allocation2 + $0xd8] sm:$0xff] %vm1352, %v707
    %1413 = vst.msk [vmem:[#allocation2 + $0xe0] sm:$0xff] %vm1352, %v708
    %1414 = vst.msk [vmem:[#allocation2 + $0xe8] sm:$0xff] %vm1352, %v709
    %1415 = vst.msk [vmem:[#allocation2 + $0xf0] sm:$0xff] %vm1352, %v710
    %1416 = vst.msk [vmem:[#allocation2 + $0xf8] sm:$0xff] %vm1352, %v711
    // Predicated region
    $region30: #{tpu_custom_call.1} parent=1 // pred_check
      %p1417 = pneg %p59
    $region31: #{tpu_custom_call.1} parent=1 // pred_check_branch
      %1419 = sbr.rel (%p1417) target = $region33
    $region32: #{tpu_custom_call.1} parent=1 // pred_region
      %v1420 = vld [vmem:[#allocation2] sm:$0xff]
      %v1421 = vld [vmem:[#allocation2 + $0x8] sm:$0xff]
      %v1422 = vld [vmem:[#allocation2 + $0x10] sm:$0xff]
      %v1423 = vld [vmem:[#allocation2 + $0x18] sm:$0xff]
      %v1424 = vld [vmem:[#allocation2 + $0x20] sm:$0xff]
      %v1425 = vld [vmem:[#allocation2 + $0x28] sm:$0xff]
      %v1426 = vld [vmem:[#allocation2 + $0x30] sm:$0xff]
      %v1427 = vld [vmem:[#allocation2 + $0x38] sm:$0xff]
      %v1428 = vld [vmem:[#allocation2 + $0x40] sm:$0xff]
      %v1429 = vld [vmem:[#allocation2 + $0x48] sm:$0xff]
      %v1430 = vld [vmem:[#allocation2 + $0x50] sm:$0xff]
      %v1431 = vld [vmem:[#allocation2 + $0x58] sm:$0xff]
      %v1432 = vld [vmem:[#allocation2 + $0x60] sm:$0xff]
      %v1433 = vld [vmem:[#allocation2 + $0x68] sm:$0xff]
      %v1434 = vld [vmem:[#allocation2 + $0x70] sm:$0xff]
      %v1435 = vld [vmem:[#allocation2 + $0x78] sm:$0xff]
      %v1436 = vld [vmem:[#allocation2 + $0x80] sm:$0xff]
      %v1437 = vld [vmem:[#allocation2 + $0x88] sm:$0xff]
      %v1438 = vld [vmem:[#allocation2 + $0x90] sm:$0xff]
      %v1439 = vld [vmem:[#allocation2 + $0x98] sm:$0xff]
      %v1440 = vld [vmem:[#allocation2 + $0xa0] sm:$0xff]
      %v1441 = vld [vmem:[#allocation2 + $0xa8] sm:$0xff]
      %v1442 = vld [vmem:[#allocation2 + $0xb0] sm:$0xff]
      %v1443 = vld [vmem:[#allocation2 + $0xb8] sm:$0xff]
      %v1444 = vld [vmem:[#allocation2 + $0xc0] sm:$0xff]
      %v1445 = vld [vmem:[#allocation2 + $0xc8] sm:$0xff]
      %v1446 = vld [vmem:[#allocation2 + $0xd0] sm:$0xff]
      %v1447 = vld [vmem:[#allocation2 + $0xd8] sm:$0xff]
      %v1448 = vld [vmem:[#allocation2 + $0xe0] sm:$0xff]
      %v1449 = vld [vmem:[#allocation2 + $0xe8] sm:$0xff]
      %v1450 = vld [vmem:[#allocation2 + $0xf0] sm:$0xff]
      %v1451 = vld [vmem:[#allocation2 + $0xf8] sm:$0xff]
      %v1452 = vld [vmem:[#allocation3] sm:$0xff]
      %v1453 = vld [vmem:[#allocation3 + $0x8] sm:$0xff]
      %v1454 = vld [vmem:[#allocation3 + $0x10] sm:$0xff]
      %v1455 = vld [vmem:[#allocation3 + $0x18] sm:$0xff]
      %v1456 = vld [vmem:[#allocation3 + $0x20] sm:$0xff]
      %v1457 = vld [vmem:[#allocation3 + $0x28] sm:$0xff]
      %v1458 = vld [vmem:[#allocation3 + $0x30] sm:$0xff]
      %v1459 = vld [vmem:[#allocation3 + $0x38] sm:$0xff]
      %v1460 = vld [vmem:[#allocation3 + $0x40] sm:$0xff]
      %v1461 = vld [vmem:[#allocation3 + $0x48] sm:$0xff]
      %v1462 = vld [vmem:[#allocation3 + $0x50] sm:$0xff]
      %v1463 = vld [vmem:[#allocation3 + $0x58] sm:$0xff]
      %v1464 = vld [vmem:[#allocation3 + $0x60] sm:$0xff]
      %v1465 = vld [vmem:[#allocation3 + $0x68] sm:$0xff]
      %v1466 = vld [vmem:[#allocation3 + $0x70] sm:$0xff]
      %v1467 = vld [vmem:[#allocation3 + $0x78] sm:$0xff]
      %v1468 = vld [vmem:[#allocation3 + $0x80] sm:$0xff]
      %v1469 = vld [vmem:[#allocation3 + $0x88] sm:$0xff]
      %v1470 = vld [vmem:[#allocation3 + $0x90] sm:$0xff]
      %v1471 = vld [vmem:[#allocation3 + $0x98] sm:$0xff]
      %v1472 = vld [vmem:[#allocation3 + $0xa0] sm:$0xff]
      %v1473 = vld [vmem:[#allocation3 + $0xa8] sm:$0xff]
      %v1474 = vld [vmem:[#allocation3 + $0xb0] sm:$0xff]
      %v1475 = vld [vmem:[#allocation3 + $0xb8] sm:$0xff]
      %v1476 = vld [vmem:[#allocation3 + $0xc0] sm:$0xff]
      %v1477 = vld [vmem:[#allocation3 + $0xc8] sm:$0xff]
      %v1478 = vld [vmem:[#allocation3 + $0xd0] sm:$0xff]
      %v1479 = vld [vmem:[#allocation3 + $0xd8] sm:$0xff]
      %v1480 = vld [vmem:[#allocation3 + $0xe0] sm:$0xff]
      %v1481 = vld [vmem:[#allocation3 + $0xe8] sm:$0xff]
      %v1482 = vld [vmem:[#allocation3 + $0xf0] sm:$0xff]
      %v1483 = vld [vmem:[#allocation3 + $0xf8] sm:$0xff]
      %v1484 = vlog2.pop %v1452
      %v1485 = vmul.f32 %v1484, 0.6931472
      %v1486 = vlog2.pop %v1453
      %v1487 = vmul.f32 %v1486, 0.6931472
      %v1488 = vlog2.pop %v1454
      %v1489 = vmul.f32 %v1488, 0.6931472
      %v1490 = vlog2.pop %v1455
      %v1491 = vmul.f32 %v1490, 0.6931472
      %v1492 = vlog2.pop %v1456
      %v1493 = vmul.f32 %v1492, 0.6931472
      %v1494 = vlog2.pop %v1457
      %v1495 = vmul.f32 %v1494, 0.6931472
      %v1496 = vlog2.pop %v1458
      %v1497 = vmul.f32 %v1496, 0.6931472
      %v1498 = vlog2.pop %v1459
      %v1499 = vmul.f32 %v1498, 0.6931472
      %v1500 = vlog2.pop %v1460
      %v1501 = vmul.f32 %v1500, 0.6931472
      %v1502 = vlog2.pop %v1461
      %v1503 = vmul.f32 %v1502, 0.6931472
      %v1504 = vlog2.pop %v1462
      %v1505 = vmul.f32 %v1504, 0.6931472
      %v1506 = vlog2.pop %v1463
      %v1507 = vmul.f32 %v1506, 0.6931472
      %v1508 = vlog2.pop %v1464
      %v1509 = vmul.f32 %v1508, 0.6931472
      %v1510 = vlog2.pop %v1465
      %v1511 = vmul.f32 %v1510, 0.6931472
      %v1512 = vlog2.pop %v1466
      %v1513 = vmul.f32 %v1512, 0.6931472
      %v1514 = vlog2.pop %v1467
      %v1515 = vmul.f32 %v1514, 0.6931472
      %v1516 = vlog2.pop %v1468
      %v1517 = vmul.f32 %v1516, 0.6931472
      %v1518 = vlog2.pop %v1469
      %v1519 = vmul.f32 %v1518, 0.6931472
      %v1520 = vlog2.pop %v1470
      %v1521 = vmul.f32 %v1520, 0.6931472
      %v1522 = vlog2.pop %v1471
      %v1523 = vmul.f32 %v1522, 0.6931472
      %v1524 = vlog2.pop %v1472
      %v1525 = vmul.f32 %v1524, 0.6931472
      %v1526 = vlog2.pop %v1473
      %v1527 = vmul.f32 %v1526, 0.6931472
      %v1528 = vlog2.pop %v1474
      %v1529 = vmul.f32 %v1528, 0.6931472
      %v1530 = vlog2.pop %v1475
      %v1531 = vmul.f32 %v1530, 0.6931472
      %v1532 = vlog2.pop %v1476
      %v1533 = vmul.f32 %v1532, 0.6931472
      %v1534 = vlog2.pop %v1477
      %v1535 = vmul.f32 %v1534, 0.6931472
      %v1536 = vlog2.pop %v1478
      %v1537 = vmul.f32 %v1536, 0.6931472
      %v1538 = vlog2.pop %v1479
      %v1539 = vmul.f32 %v1538, 0.6931472
      %v1540 = vlog2.pop %v1480
      %v1541 = vmul.f32 %v1540, 0.6931472
      %v1542 = vlog2.pop %v1481
      %v1543 = vmul.f32 %v1542, 0.6931472
      %v1544 = vlog2.pop %v1482
      %v1545 = vmul.f32 %v1544, 0.6931472
      %v1546 = vlog2.pop %v1483
      %v1547 = vmul.f32 %v1546, 0.6931472
      %v1548 = vadd.f32 %v1420, %v1485
      %v1549 = vadd.f32 %v1421, %v1487
      %v1550 = vadd.f32 %v1422, %v1489
      %v1551 = vadd.f32 %v1423, %v1491
      %v1552 = vadd.f32 %v1424, %v1493
      %v1553 = vadd.f32 %v1425, %v1495
      %v1554 = vadd.f32 %v1426, %v1497
      %v1555 = vadd.f32 %v1427, %v1499
      %v1556 = vadd.f32 %v1428, %v1501
      %v1557 = vadd.f32 %v1429, %v1503
      %v1558 = vadd.f32 %v1430, %v1505
      %v1559 = vadd.f32 %v1431, %v1507
      %v1560 = vadd.f32 %v1432, %v1509
      %v1561 = vadd.f32 %v1433, %v1511
      %v1562 = vadd.f32 %v1434, %v1513
      %v1563 = vadd.f32 %v1435, %v1515
      %v1564 = vadd.f32 %v1436, %v1517
      %v1565 = vadd.f32 %v1437, %v1519
      %v1566 = vadd.f32 %v1438, %v1521
      %v1567 = vadd.f32 %v1439, %v1523
      %v1568 = vadd.f32 %v1440, %v1525
      %v1569 = vadd.f32 %v1441, %v1527
      %v1570 = vadd.f32 %v1442, %v1529
      %v1571 = vadd.f32 %v1443, %v1531
      %v1572 = vadd.f32 %v1444, %v1533
      %v1573 = vadd.f32 %v1445, %v1535
      %v1574 = vadd.f32 %v1446, %v1537
      %v1575 = vadd.f32 %v1447, %v1539
      %v1576 = vadd.f32 %v1448, %v1541
      %v1577 = vadd.f32 %v1449, %v1543
      %v1578 = vadd.f32 %v1450, %v1545
      %v1579 = vadd.f32 %v1451, %v1547
      %1580 = vst.msk [vmem:[%s3] sm:$0xff] %vm1352, %v1548
      %1581 = vst.msk [vmem:[%s3 + $0x8] sm:$0xff] %vm1352, %v1549
      %1582 = vst.msk [vmem:[%s3 + $0x10] sm:$0xff] %vm1352, %v1550
      %1583 = vst.msk [vmem:[%s3 + $0x18] sm:$0xff] %vm1352, %v1551
      %1584 = vst.msk [vmem:[%s3 + $0x20] sm:$0xff] %vm1352, %v1552
      %1585 = vst.msk [vmem:[%s3 + $0x28] sm:$0xff] %vm1352, %v1553
      %1586 = vst.msk [vmem:[%s3 + $0x30] sm:$0xff] %vm1352, %v1554
      %1587 = vst.msk [vmem:[%s3 + $0x38] sm:$0xff] %vm1352, %v1555
      %1588 = vst.msk [vmem:[%s3 + $0x40] sm:$0xff] %vm1352, %v1556
      %1589 = vst.msk [vmem:[%s3 + $0x48] sm:$0xff] %vm1352, %v1557
      %1590 = vst.msk [vmem:[%s3 + $0x50] sm:$0xff] %vm1352, %v1558
      %1591 = vst.msk [vmem:[%s3 + $0x58] sm:$0xff] %vm1352, %v1559
      %1592 = vst.msk [vmem:[%s3 + $0x60] sm:$0xff] %vm1352, %v1560
      %1593 = vst.msk [vmem:[%s3 + $0x68] sm:$0xff] %vm1352, %v1561
      %1594 = vst.msk [vmem:[%s3 + $0x70] sm:$0xff] %vm1352, %v1562
      %1595 = vst.msk [vmem:[%s3 + $0x78] sm:$0xff] %vm1352, %v1563
      %1596 = vst.msk [vmem:[%s3 + $0x80] sm:$0xff] %vm1352, %v1564
      %1597 = vst.msk [vmem:[%s3 + $0x88] sm:$0xff] %vm1352, %v1565
      %1598 = vst.msk [vmem:[%s3 + $0x90] sm:$0xff] %vm1352, %v1566
      %1599 = vst.msk [vmem:[%s3 + $0x98] sm:$0xff] %vm1352, %v1567
      %1600 = vst.msk [vmem:[%s3 + $0xa0] sm:$0xff] %vm1352, %v1568
      %1601 = vst.msk [vmem:[%s3 + $0xa8] sm:$0xff] %vm1352, %v1569
      %1602 = vst.msk [vmem:[%s3 + $0xb0] sm:$0xff] %vm1352, %v1570
      %1603 = vst.msk [vmem:[%s3 + $0xb8] sm:$0xff] %vm1352, %v1571
      %1604 = vst.msk [vmem:[%s3 + $0xc0] sm:$0xff] %vm1352, %v1572
      %1605 = vst.msk [vmem:[%s3 + $0xc8] sm:$0xff] %vm1352, %v1573
      %1606 = vst.msk [vmem:[%s3 + $0xd0] sm:$0xff] %vm1352, %v1574
      %1607 = vst.msk [vmem:[%s3 + $0xd8] sm:$0xff] %vm1352, %v1575
      %1608 = vst.msk [vmem:[%s3 + $0xe0] sm:$0xff] %vm1352, %v1576
      %1609 = vst.msk [vmem:[%s3 + $0xe8] sm:$0xff] %vm1352, %v1577
      %1610 = vst.msk [vmem:[%s3 + $0xf0] sm:$0xff] %vm1352, %v1578
      %1611 = vst.msk [vmem:[%s3 + $0xf8] sm:$0xff] %vm1352, %v1579
    $region33: #{tpu_custom_call.1} parent=1 // pred_fallthru
      _
    // Predicated region
    $region34: #{tpu_custom_call.1} parent=1 // pred_check
      _
    $region35: #{tpu_custom_call.1} parent=1 // pred_check_branch
      %1613 = sbr.rel (0) target = $region37
    $region36: #{tpu_custom_call.1} parent=1 // pred_region
      _
    $region37: #{tpu_custom_call.1} parent=1 // pred_fallthru
      _
    // Predicated region
    $region38: #{tpu_custom_call.1} parent=1 // pred_check
      _
    $region39: #{tpu_custom_call.1} parent=1 // pred_check_branch
      %1615 = sbr.rel (0) target = $region41
    $region40: #{tpu_custom_call.1} parent=1 // pred_region
      _
    $region41: #{tpu_custom_call.1} parent=1 // pred_fallthru
      _
    %1616 = vsyncpa [#allocation5], 1
    %1617 = vsyncpa [#allocation7], 1

</llo_original>
